<compile_context>
chip_gen: v5e
topology: v5e:2x2
jax: 0.10.0
libtpu: 0.0.40
codegen_flags: <defaults>
</compile_context>

<pallas_src>
import functools

import jax
import jax.numpy as jnp
from jax.experimental import pallas as pl
from jax.experimental.pallas import tpu as pltpu

NB_HOP = 3
LANE = 128


def _rup(n, m=LANE):
    return ((n + m - 1) // m) * m


def _pad2(a, rows, cols):
    r, c = a.shape
    return jnp.pad(a, ((0, rows - r), (0, cols - c)))


def _block_diag(mats):
    """mats: [k, a, b] -> block-diagonal [k*a, k*b]."""
    k, a, b = mats.shape
    out = jnp.zeros((k * a, k * b), mats.dtype)
    for i in range(k):
        out = out.at[i * a:(i + 1) * a, i * b:(i + 1) * b].set(mats[i])
    return out


# --------------------------- pass 1: MLP + per-block softmax stats ----------
def _pass1_kernel(x_ref, z_ref,
                  w1, b1, w2, b2, w3, b3, w4, b4, b1t,
                  dw1, db1, dw2, db2, dw3, db3, dw4, db4,
                  logits_ref, m_ref, s_ref,
                  *, n_valid, row_tile):
    bf16 = jnp.bfloat16
    f32 = jnp.float32

    def mm(a_bf16, w_ref):
        # bf16 operands into the MXU, f32 accumulation.
        return jnp.dot(a_bf16, w_ref[...], preferred_element_type=f32)

    # g1 stack: the 3 hops are fused into block-diagonal matmuls.
    # Intermediates carried bf16 (MXU-native); bias/tanh math stays f32.
    h = jnp.tanh(mm(x_ref[...], w1) + b1[...]).astype(bf16)
    h = jnp.tanh(mm(h, w2) + b2[...]).astype(bf16)
    h = jnp.tanh(mm(h, w3) + b3[...]).astype(bf16)
    h = jnp.tanh(mm(h, w4) + b4[...]).astype(bf16)
    # (g_i(x_i) @ B1.T for all hops at once) * tiled Z_  ==  torch.cat([...], 1)
    xo = (mm(h, b1t) * z_ref[...].astype(f32)).astype(bf16)

    # D head.
    h = jnp.tanh(mm(xo, dw1) + db1[...]).astype(bf16)
    h = jnp.tanh(mm(h, dw2) + db2[...]).astype(bf16)
    h = jnp.tanh(mm(h, dw3) + db3[...]).astype(bf16)
    logits = mm(h, dw4) + db4[...]

    # Mask padded tail rows to -inf so they never enter the dim=0 softmax.
    start = pl.program_id(0) * row_tile
    rows = jax.lax.broadcasted_iota(jnp.int32, logits.shape, 0) + start
    logits = jnp.where(rows < n_valid, logits, -jnp.inf)

    # Store bf16 logits and compute the per-block stats from the SAME rounded
    # values pass 2 will re-read -> exact normalization.
    logits_bf = logits.astype(bf16)
    logits_ref[...] = logits_bf
    l = logits_bf.astype(f32)
    m_blk = jnp.max(l, axis=0, keepdims=True)                 # (1, p_d6)
    s_blk = jnp.sum(jnp.exp(l - m_blk), axis=0, keepdims=True)
    m_ref[0] = m_blk
    s_ref[0] = s_blk


# --------------------------- pass 2: normalize (streaming) ------------------
def _pass2_kernel(logits_ref, m_ref, s_ref, out_ref):
    inv = 1.0 / s_ref[...]        # exact; pass 2 is memory-bound so this is free
    out_ref[...] = jnp.exp(logits_ref[...].astype(jnp.float32) - m_ref[...]) * inv


def model_traj_forward(x_stack, params, B1, Z_, *, row_tile=256):
    """x_stack: [NB_HOP, N, d1]; returns softmax(dim=0) output [N, d6]."""
    nb_hop, N, d1 = x_stack.shape
    d2 = params["w1"].shape[2]
    d3 = params["w4"].shape[2]
    d5 = params["dw1"].shape[1]
    d6 = params["dw4"].shape[1]
    assert nb_hop == NB_HOP

    f32, bf16 = jnp.float32, jnp.bfloat16

    # Row tiling: multiple of 16 (bf16 sublane tile); default 256 fills the
    # v6e/v7x 256-wide MXU.  Clamp for tiny N; pad N and mask the tail rows.
    assert row_tile % 16 == 0, "row_tile must be a multiple of 16 (bf16 tile)"
    row_tile = max(16, min(row_tile, _rup(N, 16)))
    n_pad = _rup(N, row_tile)
    num_blocks = n_pad // row_tile

    p_in = _rup(nb_hop * d1)
    p_h = _rup(nb_hop * d2)
    p_g = _rup(nb_hop * d3)
    p_x = _rup(nb_hop * d5)
    p_d5 = _rup(d5)
    p_d6 = _rup(d6)

    # ---- pack & pad operands (lane-dense, block-diagonal) ------------------
    # Activations stored bf16 in HBM (halves input DMA); rows zero-padded.
    x_packed = _pad2(jnp.concatenate(list(x_stack), axis=1), n_pad, p_in).astype(bf16)
    # TODO(synk): for large d5 (3*d5 spanning multiple 128-lane slabs) pass Z_
    # once and tile it in-kernel to cut its HBM traffic ~3x; at these dims the
    # pre-tiled padded width equals the single-copy width so there is no gain.
    z_packed = _pad2(jnp.tile(Z_, (1, nb_hop)), n_pad, p_x).astype(bf16)

    w1 = _pad2(_block_diag(params["w1"]), p_in, p_h).astype(bf16)
    b1 = _pad2(jnp.concatenate(list(params["b1"]), axis=1), 1, p_h).astype(f32)
    w2 = _pad2(_block_diag(params["w2"]), p_h, p_h).astype(bf16)
    b2 = _pad2(jnp.concatenate(list(params["b2"]), axis=1), 1, p_h).astype(f32)
    w3 = _pad2(_block_diag(params["w3"]), p_h, p_h).astype(bf16)
    b3 = _pad2(jnp.concatenate(list(params["b3"]), axis=1), 1, p_h).astype(f32)
    w4 = _pad2(_block_diag(params["w4"]), p_h, p_g).astype(bf16)
    b4 = _pad2(jnp.concatenate(list(params["b4"]), axis=1), 1, p_g).astype(f32)
    b1t = _pad2(_block_diag(jnp.stack([B1.T] * nb_hop)), p_g, p_x).astype(bf16)

    dw1 = _pad2(params["dw1"], p_x, p_d5).astype(bf16)
    db1 = _pad2(params["db1"], 1, p_d5).astype(f32)
    dw2 = _pad2(params["dw2"], p_d5, p_d5).astype(bf16)
    db2 = _pad2(params["db2"], 1, p_d5).astype(f32)
    dw3 = _pad2(params["dw3"], p_d5, p_d5).astype(bf16)
    db3 = _pad2(params["db3"], 1, p_d5).astype(f32)
    dw4 = _pad2(params["dw4"], p_d5, p_d6).astype(bf16)
    db4 = _pad2(params["db4"], 1, p_d6).astype(f32)

    def row_spec(width):
        return pl.BlockSpec((row_tile, width), lambda r: (r, 0))

    def resident(shape):
        # Constant index_map -> fetched once, stays VMEM-resident across blocks.
        return pl.BlockSpec(shape, lambda r: (0, 0))

    kernel1 = functools.partial(_pass1_kernel, n_valid=N, row_tile=row_tile)
    logits, m_blk, s_blk = pl.pallas_call(
        kernel1,
        grid=(num_blocks,),
        in_specs=[
            row_spec(p_in), row_spec(p_x),
            resident((p_in, p_h)), resident((1, p_h)),
            resident((p_h, p_h)), resident((1, p_h)),
            resident((p_h, p_h)), resident((1, p_h)),
            resident((p_h, p_g)), resident((1, p_g)),
            resident((p_g, p_x)),
            resident((p_x, p_d5)), resident((1, p_d5)),
            resident((p_d5, p_d5)), resident((1, p_d5)),
            resident((p_d5, p_d5)), resident((1, p_d5)),
            resident((p_d5, p_d6)), resident((1, p_d6)),
        ],
        out_specs=(
            pl.BlockSpec((row_tile, p_d6), lambda r: (r, 0)),
            pl.BlockSpec((1, 1, p_d6), lambda r: (r, 0, 0)),
            pl.BlockSpec((1, 1, p_d6), lambda r: (r, 0, 0)),
        ),
        out_shape=(
            jax.ShapeDtypeStruct((n_pad, p_d6), bf16),            # bf16 logits
            jax.ShapeDtypeStruct((num_blocks, 1, p_d6), f32),     # per-block max
            jax.ShapeDtypeStruct((num_blocks, 1, p_d6), f32),     # per-block sum
        ),
        compiler_params=pltpu.CompilerParams(
            dimension_semantics=("parallel",),        # per-block stats -> megacore
            vmem_limit_bytes=48 * 1024 * 1024,
        ),
    )(x_packed, z_packed, w1, b1, w2, b2, w3, b3, w4, b4, b1t,
      dw1, db1, dw2, db2, dw3, db3, dw4, db4)

    # Tiny O(num_blocks x d6) log-sum-exp combine in plain JAX.
    m_all = jnp.max(m_blk, axis=0)                                 # (1, p_d6)
    s_all = jnp.sum(s_blk * jnp.exp(m_blk - m_all), axis=0)        # (1, p_d6)

    # pass 2 is pure streaming -> use a larger row tile when it divides n_pad.
    p2_tile = row_tile
    while p2_tile * 2 <= 2048 and n_pad % (p2_tile * 2) == 0:
        p2_tile *= 2

    out_padded = pl.pallas_call(
        _pass2_kernel,
        grid=(n_pad // p2_tile,),
        in_specs=[
            pl.BlockSpec((p2_tile, p_d6), lambda r: (r, 0)),
            pl.BlockSpec((1, p_d6), lambda r: (0, 0)),
            pl.BlockSpec((1, p_d6), lambda r: (0, 0)),
        ],
        out_specs=pl.BlockSpec((p2_tile, p_d6), lambda r: (r, 0)),
        out_shape=jax.ShapeDtypeStruct((n_pad, p_d6), f32),
        compiler_params=pltpu.CompilerParams(
            dimension_semantics=("parallel",),
            vmem_limit_bytes=48 * 1024 * 1024,
        ),
    )(logits, m_all, s_all)

    return out_padded[:N, :d6]


# --------------------------- references -------------------------------------
def reference_forward(x_stack, params, B1, Z_):
    """Pure f32 reference, matching the PyTorch module semantics exactly."""
    parts = []
    for i in range(NB_HOP):
        h = jnp.tanh(x_stack[i] @ params["w1"][i] + params["b1"][i])
        h = jnp.tanh(h @ params["w2"][i] + params["b2"][i])
        h = jnp.tanh(h @ params["w3"][i] + params["b3"][i])
        h = jnp.tanh(h @ params["w4"][i] + params["b4"][i])
        parts.append((h @ B1.T) * Z_)
    xo = jnp.concatenate(parts, axis=1)
    h = jnp.tanh(xo @ params["dw1"] + params["db1"])
    h = jnp.tanh(h @ params["dw2"] + params["db2"])
    h = jnp.tanh(h @ params["dw3"] + params["db3"])
    logits = h @ params["dw4"] + params["db4"]
    return jax.nn.softmax(logits, axis=0)


def reference_forward_mixed(x_stack, params, B1, Z_):
    """Reference with the identical bf16-storage / f32-accumulate recipe."""
    bf16, f32 = jnp.bfloat16, jnp.float32

    def mm(a, b):
        return jnp.dot(a.astype(bf16), b.astype(bf16), preferred_element_type=f32)

    Zb = Z_.astype(bf16).astype(f32)          # kernel stores Z_ as bf16 in HBM
    parts = []
    for i in range(NB_HOP):
        h = jnp.tanh(mm(x_stack[i], params["w1"][i]) + params["b1"][i])
        h = jnp.tanh(mm(h, params["w2"][i]) + params["b2"][i])
        h = jnp.tanh(mm(h, params["w3"][i]) + params["b3"][i])
        h = jnp.tanh(mm(h, params["w4"][i]) + params["b4"][i])
        parts.append(mm(h, B1.T) * Zb)
    xo = jnp.concatenate(parts, axis=1)
    h = jnp.tanh(mm(xo, params["dw1"]) + params["db1"])
    h = jnp.tanh(mm(h, params["dw2"]) + params["db2"])
    h = jnp.tanh(mm(h, params["dw3"]) + params["db3"])
    logits = mm(h, params["dw4"]) + params["db4"]
    logits = logits.astype(bf16).astype(f32)  # kernel stores logits as bf16
    return jax.nn.softmax(logits, axis=0)


def init_params(key, d1, d2, d3, d5, d6, nb_hop):
    ks = jax.random.split(key, 16)

    def w(k, shape, fan_in):
        return jax.random.uniform(k, shape, jnp.float32, -1.0, 1.0) / jnp.sqrt(fan_in)

    return {
        # stacked g1_layers weights, already in [in, out] layout
        "w1": w(ks[0], (nb_hop, d1, d2), d1),
        "b1": w(ks[1], (nb_hop, 1, d2), d1),
        "w2": w(ks[2], (nb_hop, d2, d2), d2),
        "b2": w(ks[3], (nb_hop, 1, d2), d2),
        "w3": w(ks[4], (nb_hop, d2, d2), d2),
        "b3": w(ks[5], (nb_hop, 1, d2), d2),
        "w4": w(ks[6], (nb_hop, d2, d3), d2),
        "b4": w(ks[7], (nb_hop, 1, d3), d2),
        # D head (nb_hop*d5 -> d5 -> d5 -> d5 -> d6), [in, out] layout
        "dw1": w(ks[8], (nb_hop * d5, d5), nb_hop * d5),
        "db1": w(ks[9], (1, d5), nb_hop * d5),
        "dw2": w(ks[10], (d5, d5), d5),
        "db2": w(ks[11], (1, d5), d5),
        "dw3": w(ks[12], (d5, d5), d5),
        "db3": w(ks[13], (1, d5), d5),
        "dw4": w(ks[14], (d5, d6), d5),
        "db4": w(ks[15], (1, d6), d5),
    }


if __name__ == "__main__":
    # small, forward-consistent dims (d4 is unused by the PyTorch module's forward)
    d1, d2, d3, d5, d6 = 32, 32, 32, 32, 16

    key = jax.random.PRNGKey(0)
    k_x, k_z, k_x2, k_z2, k_b1, k_p = jax.random.split(key, 6)

    params = init_params(k_p, d1, d2, d3, d5, d6, NB_HOP)
    B1 = jax.random.normal(k_b1, (d5, d3), jnp.float32)   # used as @ B1.T

    def run_and_check(N, row_tile, k_xi, k_zi):
        x_stack = jax.random.normal(k_xi, (NB_HOP, N, d1), jnp.float32)
        Z_ = jax.random.normal(k_zi, (N, d5), jnp.float32)

        out = model_traj_forward(x_stack, params, B1, Z_, row_tile=row_tile)
        out = jax.block_until_ready(out)

        ref_mixed = reference_forward_mixed(x_stack, params, B1, Z_)
        ref_f32 = reference_forward(x_stack, params, B1, Z_)

        assert out.shape == (N, d6)
        assert bool(jnp.all(jnp.isfinite(out)))
        # softmax over dim=0 -> every column sums to ~1 (exact normalization now)
        assert jnp.allclose(jnp.sum(out, axis=0), jnp.ones((d6,)), atol=2e-3), \
            f"column sums off 1: {jnp.sum(out, axis=0)}"
        # tight check vs a reference using the identical bf16 recipe
        assert jnp.allclose(out, ref_mixed, atol=5e-4, rtol=5e-3), \
            f"mismatch vs bf16 reference (max abs {jnp.max(jnp.abs(out - ref_mixed))})"
        # looser check vs the pure-f32 PyTorch-equivalent reference
        assert jnp.allclose(out, ref_f32, atol=5e-3, rtol=8e-2), \
            f"mismatch vs f32 reference (max abs {jnp.max(jnp.abs(out - ref_f32))})"

    # config A: small explicit tile -> exercises multi-block per-block softmax
    # stats, the JAX log-sum-exp combine and tail-row masking (50 -> pad 64).
    run_and_check(N=50, row_tile=16, k_xi=k_x, k_zi=k_z)

    # config B: default large tile (256) -> 3 row blocks with a ragged tail.
    run_and_check(N=600, row_tile=256, k_xi=k_x2, k_zi=k_z2)

    print("KERNEL_OK")
</pallas_src>

<mosaic_0001>
module attributes {stable_mosaic.version = 11 : i64} {
  func.func @_pass1_kernel(%arg0: i32, %arg1: memref<16x128xbf16, #tpu.memory_space<vmem>>, %arg2: memref<16x128xbf16, #tpu.memory_space<vmem>>, %arg3: memref<128x128xbf16, #tpu.memory_space<vmem>>, %arg4: memref<1x128xf32, #tpu.memory_space<vmem>>, %arg5: memref<128x128xbf16, #tpu.memory_space<vmem>>, %arg6: memref<1x128xf32, #tpu.memory_space<vmem>>, %arg7: memref<128x128xbf16, #tpu.memory_space<vmem>>, %arg8: memref<1x128xf32, #tpu.memory_space<vmem>>, %arg9: memref<128x128xbf16, #tpu.memory_space<vmem>>, %arg10: memref<1x128xf32, #tpu.memory_space<vmem>>, %arg11: memref<128x128xbf16, #tpu.memory_space<vmem>>, %arg12: memref<128x128xbf16, #tpu.memory_space<vmem>>, %arg13: memref<1x128xf32, #tpu.memory_space<vmem>>, %arg14: memref<128x128xbf16, #tpu.memory_space<vmem>>, %arg15: memref<1x128xf32, #tpu.memory_space<vmem>>, %arg16: memref<128x128xbf16, #tpu.memory_space<vmem>>, %arg17: memref<1x128xf32, #tpu.memory_space<vmem>>, %arg18: memref<128x128xbf16, #tpu.memory_space<vmem>>, %arg19: memref<1x128xf32, #tpu.memory_space<vmem>>, %arg20: memref<16x128xbf16, #tpu.memory_space<vmem>>, %arg21: memref<1x1x128xf32, #tpu.memory_space<vmem>>, %arg22: memref<1x1x128xf32, #tpu.memory_space<vmem>>) attributes {dimension_semantics = [#tpu.dimension_semantics<parallel>], iteration_bounds = array<i64: 4>, scalar_prefetch = 0 : i64, scratch_operands = 0 : i64, tpu.core_type = #tpu.core_type<tc>, window_params = [{transform_indices = @transform_0, window_bounds = array<i64: 16, 128>}, {transform_indices = @transform_1, window_bounds = array<i64: 16, 128>}, {pipeline_mode = #tpu.pipeline_mode<synchronous>, transform_indices = @transform_2, window_bounds = array<i64: 128, 128>}, {pipeline_mode = #tpu.pipeline_mode<synchronous>, transform_indices = @transform_3, window_bounds = array<i64: 1, 128>}, {pipeline_mode = #tpu.pipeline_mode<synchronous>, transform_indices = @transform_4, window_bounds = array<i64: 128, 128>}, {pipeline_mode = #tpu.pipeline_mode<synchronous>, transform_indices = @transform_5, window_bounds = array<i64: 1, 128>}, {pipeline_mode = #tpu.pipeline_mode<synchronous>, transform_indices = @transform_6, window_bounds = array<i64: 128, 128>}, {pipeline_mode = #tpu.pipeline_mode<synchronous>, transform_indices = @transform_7, window_bounds = array<i64: 1, 128>}, {pipeline_mode = #tpu.pipeline_mode<synchronous>, transform_indices = @transform_8, window_bounds = array<i64: 128, 128>}, {pipeline_mode = #tpu.pipeline_mode<synchronous>, transform_indices = @transform_9, window_bounds = array<i64: 1, 128>}, {pipeline_mode = #tpu.pipeline_mode<synchronous>, transform_indices = @transform_10, window_bounds = array<i64: 128, 128>}, {pipeline_mode = #tpu.pipeline_mode<synchronous>, transform_indices = @transform_11, window_bounds = array<i64: 128, 128>}, {pipeline_mode = #tpu.pipeline_mode<synchronous>, transform_indices = @transform_12, window_bounds = array<i64: 1, 128>}, {pipeline_mode = #tpu.pipeline_mode<synchronous>, transform_indices = @transform_13, window_bounds = array<i64: 128, 128>}, {pipeline_mode = #tpu.pipeline_mode<synchronous>, transform_indices = @transform_14, window_bounds = array<i64: 1, 128>}, {pipeline_mode = #tpu.pipeline_mode<synchronous>, transform_indices = @transform_15, window_bounds = array<i64: 128, 128>}, {pipeline_mode = #tpu.pipeline_mode<synchronous>, transform_indices = @transform_16, window_bounds = array<i64: 1, 128>}, {pipeline_mode = #tpu.pipeline_mode<synchronous>, transform_indices = @transform_17, window_bounds = array<i64: 128, 128>}, {pipeline_mode = #tpu.pipeline_mode<synchronous>, transform_indices = @transform_18, window_bounds = array<i64: 1, 128>}, {transform_indices = @transform_19, window_bounds = array<i64: 16, 128>}, {transform_indices = @transform_20, window_bounds = array<i64: 1, 1, 128>}, {transform_indices = @transform_21, window_bounds = array<i64: 1, 1, 128>}]} {
    %c0 = arith.constant 0 : index
    %c0_0 = arith.constant 0 : index
    %0 = vector.load %arg1[%c0, %c0_0] : memref<16x128xbf16, #tpu.memory_space<vmem>>, vector<16x128xbf16>
    %c0_1 = arith.constant 0 : index
    %c0_2 = arith.constant 0 : index
    %1 = vector.load %arg3[%c0_1, %c0_2] : memref<128x128xbf16, #tpu.memory_space<vmem>>, vector<128x128xbf16>
    %cst = arith.constant dense<0.000000e+00> : vector<16x128xf32>
    %2 = tpu.matmul %0, %1, %cst {dimension_numbers = #tpu.dot_dimension_numbers<[1], [0], [0], [1], [0, 0, 1, 1], [], []>} : vector<16x128xbf16>, vector<128x128xbf16>, vector<16x128xf32> -> vector<16x128xf32>
    %c0_3 = arith.constant 0 : index
    %c0_4 = arith.constant 0 : index
    %3 = vector.load %arg4[%c0_3, %c0_4] : memref<1x128xf32, #tpu.memory_space<vmem>>, vector<1x128xf32>
    %4 = vector.broadcast %3 : vector<1x128xf32> to vector<16x128xf32>
    %5 = arith.addf %2, %4 : vector<16x128xf32>
    %6 = math.tanh %5 : vector<16x128xf32>
    %7 = arith.truncf %6 : vector<16x128xf32> to vector<16x128xbf16>
    %c0_5 = arith.constant 0 : index
    %c0_6 = arith.constant 0 : index
    %8 = vector.load %arg5[%c0_5, %c0_6] : memref<128x128xbf16, #tpu.memory_space<vmem>>, vector<128x128xbf16>
    %cst_7 = arith.constant dense<0.000000e+00> : vector<16x128xf32>
    %9 = tpu.matmul %7, %8, %cst_7 {dimension_numbers = #tpu.dot_dimension_numbers<[1], [0], [0], [1], [0, 0, 1, 1], [], []>} : vector<16x128xbf16>, vector<128x128xbf16>, vector<16x128xf32> -> vector<16x128xf32>
    %c0_8 = arith.constant 0 : index
    %c0_9 = arith.constant 0 : index
    %10 = vector.load %arg6[%c0_8, %c0_9] : memref<1x128xf32, #tpu.memory_space<vmem>>, vector<1x128xf32>
    %11 = vector.broadcast %10 : vector<1x128xf32> to vector<16x128xf32>
    %12 = arith.addf %9, %11 : vector<16x128xf32>
    %13 = math.tanh %12 : vector<16x128xf32>
    %14 = arith.truncf %13 : vector<16x128xf32> to vector<16x128xbf16>
    %c0_10 = arith.constant 0 : index
    %c0_11 = arith.constant 0 : index
    %15 = vector.load %arg7[%c0_10, %c0_11] : memref<128x128xbf16, #tpu.memory_space<vmem>>, vector<128x128xbf16>
    %cst_12 = arith.constant dense<0.000000e+00> : vector<16x128xf32>
    %16 = tpu.matmul %14, %15, %cst_12 {dimension_numbers = #tpu.dot_dimension_numbers<[1], [0], [0], [1], [0, 0, 1, 1], [], []>} : vector<16x128xbf16>, vector<128x128xbf16>, vector<16x128xf32> -> vector<16x128xf32>
    %c0_13 = arith.constant 0 : index
    %c0_14 = arith.constant 0 : index
    %17 = vector.load %arg8[%c0_13, %c0_14] : memref<1x128xf32, #tpu.memory_space<vmem>>, vector<1x128xf32>
    %18 = vector.broadcast %17 : vector<1x128xf32> to vector<16x128xf32>
    %19 = arith.addf %16, %18 : vector<16x128xf32>
    %20 = math.tanh %19 : vector<16x128xf32>
    %21 = arith.truncf %20 : vector<16x128xf32> to vector<16x128xbf16>
    %c0_15 = arith.constant 0 : index
    %c0_16 = arith.constant 0 : index
    %22 = vector.load %arg9[%c0_15, %c0_16] : memref<128x128xbf16, #tpu.memory_space<vmem>>, vector<128x128xbf16>
    %cst_17 = arith.constant dense<0.000000e+00> : vector<16x128xf32>
    %23 = tpu.matmul %21, %22, %cst_17 {dimension_numbers = #tpu.dot_dimension_numbers<[1], [0], [0], [1], [0, 0, 1, 1], [], []>} : vector<16x128xbf16>, vector<128x128xbf16>, vector<16x128xf32> -> vector<16x128xf32>
    %c0_18 = arith.constant 0 : index
    %c0_19 = arith.constant 0 : index
    %24 = vector.load %arg10[%c0_18, %c0_19] : memref<1x128xf32, #tpu.memory_space<vmem>>, vector<1x128xf32>
    %25 = vector.broadcast %24 : vector<1x128xf32> to vector<16x128xf32>
    %26 = arith.addf %23, %25 : vector<16x128xf32>
    %27 = math.tanh %26 : vector<16x128xf32>
    %28 = arith.truncf %27 : vector<16x128xf32> to vector<16x128xbf16>
    %c0_20 = arith.constant 0 : index
    %c0_21 = arith.constant 0 : index
    %29 = vector.load %arg11[%c0_20, %c0_21] : memref<128x128xbf16, #tpu.memory_space<vmem>>, vector<128x128xbf16>
    %cst_22 = arith.constant dense<0.000000e+00> : vector<16x128xf32>
    %30 = tpu.matmul %28, %29, %cst_22 {dimension_numbers = #tpu.dot_dimension_numbers<[1], [0], [0], [1], [0, 0, 1, 1], [], []>} : vector<16x128xbf16>, vector<128x128xbf16>, vector<16x128xf32> -> vector<16x128xf32>
    %c0_23 = arith.constant 0 : index
    %c0_24 = arith.constant 0 : index
    %31 = vector.load %arg2[%c0_23, %c0_24] : memref<16x128xbf16, #tpu.memory_space<vmem>>, vector<16x128xbf16>
    %32 = arith.extf %31 : vector<16x128xbf16> to vector<16x128xf32>
    %33 = arith.mulf %30, %32 : vector<16x128xf32>
    %34 = arith.truncf %33 : vector<16x128xf32> to vector<16x128xbf16>
    %c0_25 = arith.constant 0 : index
    %c0_26 = arith.constant 0 : index
    %35 = vector.load %arg12[%c0_25, %c0_26] : memref<128x128xbf16, #tpu.memory_space<vmem>>, vector<128x128xbf16>
    %cst_27 = arith.constant dense<0.000000e+00> : vector<16x128xf32>
    %36 = tpu.matmul %34, %35, %cst_27 {dimension_numbers = #tpu.dot_dimension_numbers<[1], [0], [0], [1], [0, 0, 1, 1], [], []>} : vector<16x128xbf16>, vector<128x128xbf16>, vector<16x128xf32> -> vector<16x128xf32>
    %c0_28 = arith.constant 0 : index
    %c0_29 = arith.constant 0 : index
    %37 = vector.load %arg13[%c0_28, %c0_29] : memref<1x128xf32, #tpu.memory_space<vmem>>, vector<1x128xf32>
    %38 = vector.broadcast %37 : vector<1x128xf32> to vector<16x128xf32>
    %39 = arith.addf %36, %38 : vector<16x128xf32>
    %40 = math.tanh %39 : vector<16x128xf32>
    %41 = arith.truncf %40 : vector<16x128xf32> to vector<16x128xbf16>
    %c0_30 = arith.constant 0 : index
    %c0_31 = arith.constant 0 : index
    %42 = vector.load %arg14[%c0_30, %c0_31] : memref<128x128xbf16, #tpu.memory_space<vmem>>, vector<128x128xbf16>
    %cst_32 = arith.constant dense<0.000000e+00> : vector<16x128xf32>
    %43 = tpu.matmul %41, %42, %cst_32 {dimension_numbers = #tpu.dot_dimension_numbers<[1], [0], [0], [1], [0, 0, 1, 1], [], []>} : vector<16x128xbf16>, vector<128x128xbf16>, vector<16x128xf32> -> vector<16x128xf32>
    %c0_33 = arith.constant 0 : index
    %c0_34 = arith.constant 0 : index
    %44 = vector.load %arg15[%c0_33, %c0_34] : memref<1x128xf32, #tpu.memory_space<vmem>>, vector<1x128xf32>
    %45 = vector.broadcast %44 : vector<1x128xf32> to vector<16x128xf32>
    %46 = arith.addf %43, %45 : vector<16x128xf32>
    %47 = math.tanh %46 : vector<16x128xf32>
    %48 = arith.truncf %47 : vector<16x128xf32> to vector<16x128xbf16>
    %c0_35 = arith.constant 0 : index
    %c0_36 = arith.constant 0 : index
    %49 = vector.load %arg16[%c0_35, %c0_36] : memref<128x128xbf16, #tpu.memory_space<vmem>>, vector<128x128xbf16>
    %cst_37 = arith.constant dense<0.000000e+00> : vector<16x128xf32>
    %50 = tpu.matmul %48, %49, %cst_37 {dimension_numbers = #tpu.dot_dimension_numbers<[1], [0], [0], [1], [0, 0, 1, 1], [], []>} : vector<16x128xbf16>, vector<128x128xbf16>, vector<16x128xf32> -> vector<16x128xf32>
    %c0_38 = arith.constant 0 : index
    %c0_39 = arith.constant 0 : index
    %51 = vector.load %arg17[%c0_38, %c0_39] : memref<1x128xf32, #tpu.memory_space<vmem>>, vector<1x128xf32>
    %52 = vector.broadcast %51 : vector<1x128xf32> to vector<16x128xf32>
    %53 = arith.addf %50, %52 : vector<16x128xf32>
    %54 = math.tanh %53 : vector<16x128xf32>
    %55 = arith.truncf %54 : vector<16x128xf32> to vector<16x128xbf16>
    %c0_40 = arith.constant 0 : index
    %c0_41 = arith.constant 0 : index
    %56 = vector.load %arg18[%c0_40, %c0_41] : memref<128x128xbf16, #tpu.memory_space<vmem>>, vector<128x128xbf16>
    %cst_42 = arith.constant dense<0.000000e+00> : vector<16x128xf32>
    %57 = tpu.matmul %55, %56, %cst_42 {dimension_numbers = #tpu.dot_dimension_numbers<[1], [0], [0], [1], [0, 0, 1, 1], [], []>} : vector<16x128xbf16>, vector<128x128xbf16>, vector<16x128xf32> -> vector<16x128xf32>
    %c0_43 = arith.constant 0 : index
    %c0_44 = arith.constant 0 : index
    %58 = vector.load %arg19[%c0_43, %c0_44] : memref<1x128xf32, #tpu.memory_space<vmem>>, vector<1x128xf32>
    %59 = vector.broadcast %58 : vector<1x128xf32> to vector<16x128xf32>
    %60 = arith.addf %57, %59 : vector<16x128xf32>
    %c16_i32 = arith.constant 16 : i32
    %61 = arith.muli %arg0, %c16_i32 : i32
    %62 = tpu.iota {dimensions = array<i32: 0>} : vector<16x128xi32>
    %63 = vector.broadcast %61 : i32 to vector<16x128xi32>
    %64 = arith.addi %62, %63 : vector<16x128xi32>
    %c50_i32 = arith.constant 50 : i32
    %65 = vector.broadcast %c50_i32 : i32 to vector<16x128xi32>
    %66 = arith.cmpi slt, %64, %65 : vector<16x128xi32>
    %cst_45 = arith.constant 0xFF800000 : f32
    %67 = vector.broadcast %cst_45 : f32 to vector<16x128xf32>
    %68 = arith.select %66, %60, %67 : vector<16x128xi1>, vector<16x128xf32>
    %69 = arith.truncf %68 : vector<16x128xf32> to vector<16x128xbf16>
    %c0_46 = arith.constant 0 : index
    %c0_47 = arith.constant 0 : index
    %70 = vector.load %arg20[%c0_46, %c0_47] : memref<16x128xbf16, #tpu.memory_space<vmem>>, vector<16x128xbf16>
    tpu.vector_store %arg20[%c0_46, %c0_47], %69 {strides = array<i32>} : memref<16x128xbf16, #tpu.memory_space<vmem>>, vector<16x128xbf16>,
    %71 = arith.extf %69 : vector<16x128xbf16> to vector<16x128xf32>
    %cst_48 = arith.constant dense<0xFF800000> : vector<128xf32>
    %72 = vector.multi_reduction <maximumf>, %71, %cst_48 [0] : vector<16x128xf32> to vector<128xf32>
    %73 = vector.shape_cast %72 : vector<128xf32> to vector<1x128xf32>
    %74 = vector.broadcast %73 : vector<1x128xf32> to vector<16x128xf32>
    %75 = arith.subf %71, %74 : vector<16x128xf32>
    %76 = math.exp %75 : vector<16x128xf32>
    %cst_49 = arith.constant dense<0.000000e+00> : vector<128xf32>
    %77 = vector.multi_reduction <add>, %76, %cst_49 [0] : vector<16x128xf32> to vector<128xf32>
    %78 = vector.shape_cast %77 : vector<128xf32> to vector<1x128xf32>
    %c0_50 = arith.constant 0 : index
    %c0_51 = arith.constant 0 : index
    %c0_52 = arith.constant 0 : index
    %79 = vector.load %arg21[%c0_50, %c0_51, %c0_52] : memref<1x1x128xf32, #tpu.memory_space<vmem>>, vector<1x1x128xf32>
    %80 = vector.shape_cast %79 : vector<1x1x128xf32> to vector<1x128xf32>
    %81 = vector.shape_cast %73 : vector<1x128xf32> to vector<1x1x128xf32>
    tpu.vector_store %arg21[%c0_50, %c0_51, %c0_52], %81 {strides = array<i32>} : memref<1x1x128xf32, #tpu.memory_space<vmem>>, vector<1x1x128xf32>,
    %c0_53 = arith.constant 0 : index
    %c0_54 = arith.constant 0 : index
    %c0_55 = arith.constant 0 : index
    %82 = vector.load %arg22[%c0_53, %c0_54, %c0_55] : memref<1x1x128xf32, #tpu.memory_space<vmem>>, vector<1x1x128xf32>
    %83 = vector.shape_cast %82 : vector<1x1x128xf32> to vector<1x128xf32>
    %84 = vector.shape_cast %78 : vector<1x128xf32> to vector<1x1x128xf32>
    tpu.vector_store %arg22[%c0_53, %c0_54, %c0_55], %84 {strides = array<i32>} : memref<1x1x128xf32, #tpu.memory_space<vmem>>, vector<1x1x128xf32>,
    return
  }
  func.func @transform_0(%arg0: i32) -> (i32, i32) {
    %c0_i32 = arith.constant 0 : i32
    %c0_i32_0 = arith.constant 0 : i32
    return %arg0, %c0_i32 : i32, i32
  }
  func.func @transform_1(%arg0: i32) -> (i32, i32) {
    %c0_i32 = arith.constant 0 : i32
    %c0_i32_0 = arith.constant 0 : i32
    return %arg0, %c0_i32 : i32, i32
  }
  func.func @transform_2(%arg0: i32) -> (i32, i32) {
    %c0_i32 = arith.constant 0 : i32
    %c0_i32_0 = arith.constant 0 : i32
    %c0_i32_1 = arith.constant 0 : i32
    return %c0_i32, %c0_i32_0 : i32, i32
  }
  func.func @transform_3(%arg0: i32) -> (i32, i32) {
    %c0_i32 = arith.constant 0 : i32
    %c0_i32_0 = arith.constant 0 : i32
    %c0_i32_1 = arith.constant 0 : i32
    return %c0_i32, %c0_i32_0 : i32, i32
  }
  func.func @transform_4(%arg0: i32) -> (i32, i32) {
    %c0_i32 = arith.constant 0 : i32
    %c0_i32_0 = arith.constant 0 : i32
    %c0_i32_1 = arith.constant 0 : i32
    return %c0_i32, %c0_i32_0 : i32, i32
  }
  func.func @transform_5(%arg0: i32) -> (i32, i32) {
    %c0_i32 = arith.constant 0 : i32
    %c0_i32_0 = arith.constant 0 : i32
    %c0_i32_1 = arith.constant 0 : i32
    return %c0_i32, %c0_i32_0 : i32, i32
  }
  func.func @transform_6(%arg0: i32) -> (i32, i32) {
    %c0_i32 = arith.constant 0 : i32
    %c0_i32_0 = arith.constant 0 : i32
    %c0_i32_1 = arith.constant 0 : i32
    return %c0_i32, %c0_i32_0 : i32, i32
  }
  func.func @transform_7(%arg0: i32) -> (i32, i32) {
    %c0_i32 = arith.constant 0 : i32
    %c0_i32_0 = arith.constant 0 : i32
    %c0_i32_1 = arith.constant 0 : i32
    return %c0_i32, %c0_i32_0 : i32, i32
  }
  func.func @transform_8(%arg0: i32) -> (i32, i32) {
    %c0_i32 = arith.constant 0 : i32
    %c0_i32_0 = arith.constant 0 : i32
    %c0_i32_1 = arith.constant 0 : i32
    return %c0_i32, %c0_i32_0 : i32, i32
  }
  func.func @transform_9(%arg0: i32) -> (i32, i32) {
    %c0_i32 = arith.constant 0 : i32
    %c0_i32_0 = arith.constant 0 : i32
    %c0_i32_1 = arith.constant 0 : i32
    return %c0_i32, %c0_i32_0 : i32, i32
  }
  func.func @transform_10(%arg0: i32) -> (i32, i32) {
    %c0_i32 = arith.constant 0 : i32
    %c0_i32_0 = arith.constant 0 : i32
    %c0_i32_1 = arith.constant 0 : i32
    return %c0_i32, %c0_i32_0 : i32, i32
  }
  func.func @transform_11(%arg0: i32) -> (i32, i32) {
    %c0_i32 = arith.constant 0 : i32
    %c0_i32_0 = arith.constant 0 : i32
    %c0_i32_1 = arith.constant 0 : i32
    return %c0_i32, %c0_i32_0 : i32, i32
  }
  func.func @transform_12(%arg0: i32) -> (i32, i32) {
    %c0_i32 = arith.constant 0 : i32
    %c0_i32_0 = arith.constant 0 : i32
    %c0_i32_1 = arith.constant 0 : i32
    return %c0_i32, %c0_i32_0 : i32, i32
  }
  func.func @transform_13(%arg0: i32) -> (i32, i32) {
    %c0_i32 = arith.constant 0 : i32
    %c0_i32_0 = arith.constant 0 : i32
    %c0_i32_1 = arith.constant 0 : i32
    return %c0_i32, %c0_i32_0 : i32, i32
  }
  func.func @transform_14(%arg0: i32) -> (i32, i32) {
    %c0_i32 = arith.constant 0 : i32
    %c0_i32_0 = arith.constant 0 : i32
    %c0_i32_1 = arith.constant 0 : i32
    return %c0_i32, %c0_i32_0 : i32, i32
  }
  func.func @transform_15(%arg0: i32) -> (i32, i32) {
    %c0_i32 = arith.constant 0 : i32
    %c0_i32_0 = arith.constant 0 : i32
    %c0_i32_1 = arith.constant 0 : i32
    return %c0_i32, %c0_i32_0 : i32, i32
  }
  func.func @transform_16(%arg0: i32) -> (i32, i32) {
    %c0_i32 = arith.constant 0 : i32
    %c0_i32_0 = arith.constant 0 : i32
    %c0_i32_1 = arith.constant 0 : i32
    return %c0_i32, %c0_i32_0 : i32, i32
  }
  func.func @transform_17(%arg0: i32) -> (i32, i32) {
    %c0_i32 = arith.constant 0 : i32
    %c0_i32_0 = arith.constant 0 : i32
    %c0_i32_1 = arith.constant 0 : i32
    return %c0_i32, %c0_i32_0 : i32, i32
  }
  func.func @transform_18(%arg0: i32) -> (i32, i32) {
    %c0_i32 = arith.constant 0 : i32
    %c0_i32_0 = arith.constant 0 : i32
    %c0_i32_1 = arith.constant 0 : i32
    return %c0_i32, %c0_i32_0 : i32, i32
  }
  func.func @transform_19(%arg0: i32) -> (i32, i32) {
    %c0_i32 = arith.constant 0 : i32
    %c0_i32_0 = arith.constant 0 : i32
    return %arg0, %c0_i32 : i32, i32
  }
  func.func @transform_20(%arg0: i32) -> (i32, i32, i32) {
    %c0_i32 = arith.constant 0 : i32
    %c0_i32_0 = arith.constant 0 : i32
    %c0_i32_1 = arith.constant 0 : i32
    return %arg0, %c0_i32, %c0_i32_0 : i32, i32, i32
  }
  func.func @transform_21(%arg0: i32) -> (i32, i32, i32) {
    %c0_i32 = arith.constant 0 : i32
    %c0_i32_0 = arith.constant 0 : i32
    %c0_i32_1 = arith.constant 0 : i32
    return %arg0, %c0_i32, %c0_i32_0 : i32, i32, i32
  }
}

</mosaic_0001>

<llo_original>
// kernel: tpu_custom_call.1
$region0: #{tpu_custom_call.1}
  #allocation0 [shape = 'u32[]', space=smem, size = 0x4, offset = 0x4, fixed_abs, tag = 'smem constant byte address 0x4 - core index']
  #allocation1 [shape = 'u32[72,128]{1,0:T(1,128)}', space=vmem, size = 0x9000, scoped, tag = 'internal scratch']
  %s0 = inlined_call_operand.hbm [shape: bf16[64,128], index: 0, kind: input, shape index: {}]
  %s1 = inlined_call_operand.hbm [shape: bf16[64,128], index: 1, kind: input, shape index: {}]
  %s2 = inlined_call_operand.hbm [shape: bf16[128,128], index: 2, kind: input, shape index: {}]
  %s3 = inlined_call_operand.vmem [shape: f32[1,128], index: 3, kind: input, shape index: {}]
  %s4 = inlined_call_operand.hbm [shape: bf16[128,128], index: 4, kind: input, shape index: {}]
  %s5 = inlined_call_operand.vmem [shape: f32[1,128], index: 5, kind: input, shape index: {}]
  %s6 = inlined_call_operand.hbm [shape: bf16[128,128], index: 6, kind: input, shape index: {}]
  %s7 = inlined_call_operand.vmem [shape: f32[1,128], index: 7, kind: input, shape index: {}]
  %s8 = inlined_call_operand.hbm [shape: bf16[128,128], index: 8, kind: input, shape index: {}]
  %s9 = inlined_call_operand.vmem [shape: f32[1,128], index: 9, kind: input, shape index: {}]
  %s10 = inlined_call_operand.hbm [shape: bf16[128,128], index: 10, kind: input, shape index: {}]
  %s11 = inlined_call_operand.hbm [shape: bf16[128,128], index: 11, kind: input, shape index: {}]
  %s12 = inlined_call_operand.vmem [shape: f32[1,128], index: 12, kind: input, shape index: {}]
  %s13 = inlined_call_operand.hbm [shape: bf16[128,128], index: 13, kind: input, shape index: {}]
  %s14 = inlined_call_operand.vmem [shape: f32[1,128], index: 14, kind: input, shape index: {}]
  %s15 = inlined_call_operand.hbm [shape: bf16[128,128], index: 15, kind: input, shape index: {}]
  %s16 = inlined_call_operand.vmem [shape: f32[1,128], index: 16, kind: input, shape index: {}]
  %s17 = inlined_call_operand.hbm [shape: bf16[128,128], index: 17, kind: input, shape index: {}]
  %s18 = inlined_call_operand.vmem [shape: f32[1,128], index: 18, kind: input, shape index: {}]
  %s19 = inlined_call_operand.hbm [shape: bf16[64,128], index: 19, kind: output, shape index: {0}]
  %s20 = inlined_call_operand.hbm [shape: f32[4,1,128], index: 20, kind: output, shape index: {1}]
  %s21 = inlined_call_operand.hbm [shape: f32[4,1,128], index: 21, kind: output, shape index: {2}]
  %22 = xla_tuple %s19, %s20, %s21
  %s23 = sld [smem:[#allocation0]]
  $region169: #{tpu_custom_call.1} parent=0
    _
  %s25 = ssub.s32 1, %s23
  %s26 = scalar_select 0, %s25, %s23
  $region1: #{tpu_custom_call.1} parent=0
    #allocation2 [shape = 'u8[8192]{0}', space=vmem, size = 0x2000, scoped, tag = 'input window, operand 0']
    #allocation3 [shape = 's32[2]{0}', space=sflag, size = 0x8, scoped, tag = 'scoped memory for tpu_custom_call.1']
    #allocation4 [shape = 's32[2]{0}', space=sflag, size = 0x8, scoped, tag = 'scoped memory for tpu_custom_call.1']
    #allocation5 [shape = 'u8[8192]{0}', space=vmem, size = 0x2000, scoped, tag = 'input window, operand 1']
    #allocation6 [shape = 's32[2]{0}', space=sflag, size = 0x8, scoped, tag = 'scoped memory for tpu_custom_call.1']
    #allocation7 [shape = 'u8[32768]{0}', space=vmem, size = 0x8000, scoped, tag = 'input window, operand 2, single buffered']
    #allocation8 [shape = 'u8[32768]{0}', space=vmem, size = 0x8000, scoped, tag = 'input window, operand 4, single buffered']
    #allocation9 [shape = 's32[1]{0}', space=sflag, size = 0x4, scoped, tag = 'scoped memory for tpu_custom_call.1']
    #allocation10 [shape = 'u8[32768]{0}', space=vmem, size = 0x8000, scoped, tag = 'input window, operand 6, single buffered']
    #allocation11 [shape = 'u8[32768]{0}', space=vmem, size = 0x8000, scoped, tag = 'input window, operand 8, single buffered']
    #allocation12 [shape = 's32[1]{0}', space=sflag, size = 0x4, scoped, tag = 'scoped memory for tpu_custom_call.1']
    #allocation13 [shape = 'u8[32768]{0}', space=vmem, size = 0x8000, scoped, tag = 'input window, operand 10, single buffered']
    #allocation14 [shape = 'u8[32768]{0}', space=vmem, size = 0x8000, scoped, tag = 'input window, operand 11, single buffered']
    #allocation15 [shape = 's32[1]{0}', space=sflag, size = 0x4, scoped, tag = 'scoped memory for tpu_custom_call.1']
    #allocation16 [shape = 'u8[32768]{0}', space=vmem, size = 0x8000, scoped, tag = 'input window, operand 13, single buffered']
    #allocation17 [shape = 'u8[32768]{0}', space=vmem, size = 0x8000, scoped, tag = 'input window, operand 15, single buffered']
    #allocation18 [shape = 's32[1]{0}', space=sflag, size = 0x4, scoped, tag = 'scoped memory for tpu_custom_call.1']
    #allocation19 [shape = 'u8[32768]{0}', space=vmem, size = 0x8000, scoped, tag = 'input window, operand 17, single buffered']
    #allocation20 [shape = 'u8[8192]{0}', space=vmem, size = 0x2000, scoped, tag = 'output window, operand 0']
    #allocation21 [shape = 'u8[1024]{0}', space=vmem, size = 0x400, scoped, tag = 'output window, operand 1']
    #allocation22 [shape = 's32[2]{0}', space=sflag, size = 0x8, scoped, tag = 'scoped memory for tpu_custom_call.1']
    #allocation23 [shape = 'u8[1024]{0}', space=vmem, size = 0x400, scoped, tag = 'output window, operand 2']
    %27 = vsyncpa [#allocation3], 0
    %s28 = scalar_lea.sflag [#allocation3], 1
    %29 = vsyncpa %s28, 0
    %30 = vsyncpa [#allocation6], 0
    %s31 = scalar_lea.sflag [#allocation6], 1
    %32 = vsyncpa %s31, 0
    %33 = vsyncpa [#allocation9], 0
    %34 = vsyncpa [#allocation12], 0
    %35 = vsyncpa [#allocation15], 0
    %36 = vsyncpa [#allocation18], 0
    %37 = vsyncpa [#allocation4], 0
    %s38 = scalar_lea.sflag [#allocation4], 1
    %39 = vsyncpa %s38, 0
    %40 = vsyncpa [#allocation22], 0
    %s41 = scalar_lea.sflag [#allocation22], 1
    %42 = vsyncpa %s41, 0
    loop: start=0, step=1, limit=6
    $region2: #{tpu_custom_call.1} parent=1 // loop_pre_header
      _
    $region3: #{tpu_custom_call.1} parent=1 // loop_header
      %s44 = sphi 0, %s48
      %p45 = scmp.ge.s32.totalorder %s44, 6
      %s54 = sphi 0, %s56
      %s57 = sphi 0, %s54
      %s58 = sphi 0, %s57
      %s74 = sphi 0, %s58
      %s80 = sphi 0, %s82
      %s83 = sphi 0, %s80
      %s84 = sphi 0, %s83
      %s100 = sphi 0, %s84
      %s104 = sphi 0, %s104
      %s106 = sphi 0, %s104
      %s107 = sphi 0, %s106
      %s121 = sphi 0, %s107
      %s125 = sphi 0, %s125
      %s127 = sphi 0, %s125
      %s128 = sphi 0, %s127
      %s142 = sphi 0, %s128
      %s146 = sphi 0, %s146
      %s148 = sphi 0, %s146
      %s149 = sphi 0, %s148
      %s163 = sphi 0, %s149
      %s167 = sphi 0, %s167
      %s169 = sphi 0, %s167
      %s170 = sphi 0, %s169
      %s184 = sphi 0, %s170
      %s188 = sphi 0, %s188
      %s190 = sphi 0, %s188
      %s191 = sphi 0, %s190
      %s205 = sphi 0, %s191
      %s209 = sphi 0, %s209
      %s211 = sphi 0, %s209
      %s212 = sphi 0, %s211
      %s226 = sphi 0, %s212
      %s230 = sphi 0, %s230
      %s232 = sphi 0, %s230
      %s233 = sphi 0, %s232
      %s247 = sphi 0, %s233
      %s251 = sphi 0, %s251
      %s253 = sphi 0, %s251
      %s254 = sphi 0, %s253
      %s268 = sphi 0, %s254
      %s272 = sphi 0, %s272
      %s274 = sphi 0, %s272
      %s275 = sphi 0, %s274
      %s289 = sphi 0, %s275
      %s293 = sphi 0, %s293
      %s295 = sphi 0, %s293
      %s296 = sphi 0, %s295
      %s310 = sphi 0, %s296
      %s314 = sphi 0, %s314
      %s316 = sphi 0, %s314
      %s317 = sphi 0, %s316
      %s331 = sphi 0, %s317
      %s335 = sphi 0, %s335
      %s337 = sphi 0, %s335
      %s338 = sphi 0, %s337
      %s352 = sphi 0, %s338
      %s356 = sphi 0, %s356
      %s358 = sphi 0, %s356
      %s359 = sphi 0, %s358
      %s373 = sphi 0, %s359
      %s377 = sphi 0, %s377
      %s379 = sphi 0, %s377
      %s380 = sphi 0, %s379
      %s394 = sphi 0, %s380
      %s398 = sphi 0, %s398
      %s400 = sphi 0, %s398
      %s401 = sphi 0, %s400
      %s415 = sphi 0, %s401
      %s419 = sphi 0, %s419
      %s421 = sphi 0, %s419
      %s422 = sphi 0, %s421
      %s436 = sphi 0, %s422
      %s440 = sphi 0, %s440
      %s442 = sphi 0, %s440
      %s443 = sphi 0, %s442
      %s457 = sphi 0, %s443
      %s463 = sphi 0, %s465
      %s466 = sphi 0, %s463
      %s467 = sphi 0, %s466
      %s483 = sphi 0, %s467
      %s489 = sphi 0, %s491
      %s492 = sphi 0, %s489
      %s493 = sphi 0, %s492
      %s509 = sphi 0, %s493
      %s515 = sphi 0, %s517
      %s518 = sphi 0, %s515
      %s519 = sphi 0, %s518
      %s535 = sphi 0, %s519
    $region4: #{tpu_custom_call.1} parent=1 // loop_header_branch
      %47 = sbr.rel (%p45) target = $region8
    $region5: #{tpu_custom_call.1} parent=1 // loop_body
      %s49 = ssub.s32 %s44, 1
      %s50 = ssub.s32 %s44, 2
      %s51 = sadd.s32 %s44, 1
      %s52 = ssub.s32 %s44, %s51
      %p53 = scmp.eq.s32.totalorder %s52, 0
      %s55 = sadd.s32 %s54, 1
      %s56 = scalar_select %p53, %s54, %s55
      %p59 = pneg %p53
      %p60 = scmp.eq.s32.totalorder %s44, 3
      %p61 = por %p59, %p60
      %p62 = scmp.ne.s32.totalorder %s54, %s57
      %p63 = scmp.eq.s32.totalorder %s44, 0
      %p64 = por %p62, %p63
      %p65 = scmp.ne.s32.totalorder %s54, %s57
      %p66 = scmp.eq.s32.totalorder %s49, 3
      %p67 = por %p65, %p66
      %p68 = scmp.ne.s32.totalorder %s57, %s58
      %p69 = scmp.eq.s32.totalorder %s49, 0
      %p70 = por %p68, %p69
      %p71 = scmp.ne.s32.totalorder %s57, %s58
      %p72 = scmp.eq.s32.totalorder %s50, 3
      %p73 = por %p71, %p72
      %p75 = scmp.ne.s32.totalorder %s58, %s74
      %p76 = scmp.eq.s32.totalorder %s50, 0
      %p77 = por %p75, %p76
      %s78 = ssub.s32 %s44, %s51
      %p79 = scmp.eq.s32.totalorder %s78, 0
      %s81 = sadd.s32 %s80, 1
      %s82 = scalar_select %p79, %s80, %s81
      %p85 = pneg %p79
      %p86 = scmp.eq.s32.totalorder %s44, 3
      %p87 = por %p85, %p86
      %p88 = scmp.ne.s32.totalorder %s80, %s83
      %p89 = scmp.eq.s32.totalorder %s44, 0
      %p90 = por %p88, %p89
      %p91 = scmp.ne.s32.totalorder %s80, %s83
      %p92 = scmp.eq.s32.totalorder %s49, 3
      %p93 = por %p91, %p92
      %p94 = scmp.ne.s32.totalorder %s83, %s84
      %p95 = scmp.eq.s32.totalorder %s49, 0
      %p96 = por %p94, %p95
      %p97 = scmp.ne.s32.totalorder %s83, %s84
      %p98 = scmp.eq.s32.totalorder %s50, 3
      %p99 = por %p97, %p98
      %p101 = scmp.ne.s32.totalorder %s84, %s100
      %p102 = scmp.eq.s32.totalorder %s50, 0
      %p103 = por %p101, %p102
      %s105 = sadd.s32 %s104, 1
      %p108 = scmp.eq.s32.totalorder %s44, 3
      %p109 = scmp.ne.s32.totalorder %s104, %s106
      %p110 = scmp.eq.s32.totalorder %s44, 0
      %p111 = por %p109, %p110
      %p112 = scmp.ne.s32.totalorder %s104, %s106
      %p113 = scmp.eq.s32.totalorder %s49, 3
      %p114 = por %p112, %p113
      %p115 = scmp.ne.s32.totalorder %s106, %s107
      %p116 = scmp.eq.s32.totalorder %s49, 0
      %p117 = por %p115, %p116
      %p118 = scmp.ne.s32.totalorder %s106, %s107
      %p119 = scmp.eq.s32.totalorder %s50, 3
      %p120 = por %p118, %p119
      %p122 = scmp.ne.s32.totalorder %s107, %s121
      %p123 = scmp.eq.s32.totalorder %s50, 0
      %p124 = por %p122, %p123
      %s126 = sadd.s32 %s125, 1
      %p129 = scmp.eq.s32.totalorder %s44, 3
      %p130 = scmp.ne.s32.totalorder %s125, %s127
      %p131 = scmp.eq.s32.totalorder %s44, 0
      %p132 = por %p130, %p131
      %p133 = scmp.ne.s32.totalorder %s125, %s127
      %p134 = scmp.eq.s32.totalorder %s49, 3
      %p135 = por %p133, %p134
      %p136 = scmp.ne.s32.totalorder %s127, %s128
      %p137 = scmp.eq.s32.totalorder %s49, 0
      %p138 = por %p136, %p137
      %p139 = scmp.ne.s32.totalorder %s127, %s128
      %p140 = scmp.eq.s32.totalorder %s50, 3
      %p141 = por %p139, %p140
      %p143 = scmp.ne.s32.totalorder %s128, %s142
      %p144 = scmp.eq.s32.totalorder %s50, 0
      %p145 = por %p143, %p144
      %s147 = sadd.s32 %s146, 1
      %p150 = scmp.eq.s32.totalorder %s44, 3
      %p151 = scmp.ne.s32.totalorder %s146, %s148
      %p152 = scmp.eq.s32.totalorder %s44, 0
      %p153 = por %p151, %p152
      %p154 = scmp.ne.s32.totalorder %s146, %s148
      %p155 = scmp.eq.s32.totalorder %s49, 3
      %p156 = por %p154, %p155
      %p157 = scmp.ne.s32.totalorder %s148, %s149
      %p158 = scmp.eq.s32.totalorder %s49, 0
      %p159 = por %p157, %p158
      %p160 = scmp.ne.s32.totalorder %s148, %s149
      %p161 = scmp.eq.s32.totalorder %s50, 3
      %p162 = por %p160, %p161
      %p164 = scmp.ne.s32.totalorder %s149, %s163
      %p165 = scmp.eq.s32.totalorder %s50, 0
      %p166 = por %p164, %p165
      %s168 = sadd.s32 %s167, 1
      %p171 = scmp.eq.s32.totalorder %s44, 3
      %p172 = scmp.ne.s32.totalorder %s167, %s169
      %p173 = scmp.eq.s32.totalorder %s44, 0
      %p174 = por %p172, %p173
      %p175 = scmp.ne.s32.totalorder %s167, %s169
      %p176 = scmp.eq.s32.totalorder %s49, 3
      %p177 = por %p175, %p176
      %p178 = scmp.ne.s32.totalorder %s169, %s170
      %p179 = scmp.eq.s32.totalorder %s49, 0
      %p180 = por %p178, %p179
      %p181 = scmp.ne.s32.totalorder %s169, %s170
      %p182 = scmp.eq.s32.totalorder %s50, 3
      %p183 = por %p181, %p182
      %p185 = scmp.ne.s32.totalorder %s170, %s184
      %p186 = scmp.eq.s32.totalorder %s50, 0
      %p187 = por %p185, %p186
      %s189 = sadd.s32 %s188, 1
      %p192 = scmp.eq.s32.totalorder %s44, 3
      %p193 = scmp.ne.s32.totalorder %s188, %s190
      %p194 = scmp.eq.s32.totalorder %s44, 0
      %p195 = por %p193, %p194
      %p196 = scmp.ne.s32.totalorder %s188, %s190
      %p197 = scmp.eq.s32.totalorder %s49, 3
      %p198 = por %p196, %p197
      %p199 = scmp.ne.s32.totalorder %s190, %s191
      %p200 = scmp.eq.s32.totalorder %s49, 0
      %p201 = por %p199, %p200
      %p202 = scmp.ne.s32.totalorder %s190, %s191
      %p203 = scmp.eq.s32.totalorder %s50, 3
      %p204 = por %p202, %p203
      %p206 = scmp.ne.s32.totalorder %s191, %s205
      %p207 = scmp.eq.s32.totalorder %s50, 0
      %p208 = por %p206, %p207
      %s210 = sadd.s32 %s209, 1
      %p213 = scmp.eq.s32.totalorder %s44, 3
      %p214 = scmp.ne.s32.totalorder %s209, %s211
      %p215 = scmp.eq.s32.totalorder %s44, 0
      %p216 = por %p214, %p215
      %p217 = scmp.ne.s32.totalorder %s209, %s211
      %p218 = scmp.eq.s32.totalorder %s49, 3
      %p219 = por %p217, %p218
      %p220 = scmp.ne.s32.totalorder %s211, %s212
      %p221 = scmp.eq.s32.totalorder %s49, 0
      %p222 = por %p220, %p221
      %p223 = scmp.ne.s32.totalorder %s211, %s212
      %p224 = scmp.eq.s32.totalorder %s50, 3
      %p225 = por %p223, %p224
      %p227 = scmp.ne.s32.totalorder %s212, %s226
      %p228 = scmp.eq.s32.totalorder %s50, 0
      %p229 = por %p227, %p228
      %s231 = sadd.s32 %s230, 1
      %p234 = scmp.eq.s32.totalorder %s44, 3
      %p235 = scmp.ne.s32.totalorder %s230, %s232
      %p236 = scmp.eq.s32.totalorder %s44, 0
      %p237 = por %p235, %p236
      %p238 = scmp.ne.s32.totalorder %s230, %s232
      %p239 = scmp.eq.s32.totalorder %s49, 3
      %p240 = por %p238, %p239
      %p241 = scmp.ne.s32.totalorder %s232, %s233
      %p242 = scmp.eq.s32.totalorder %s49, 0
      %p243 = por %p241, %p242
      %p244 = scmp.ne.s32.totalorder %s232, %s233
      %p245 = scmp.eq.s32.totalorder %s50, 3
      %p246 = por %p244, %p245
      %p248 = scmp.ne.s32.totalorder %s233, %s247
      %p249 = scmp.eq.s32.totalorder %s50, 0
      %p250 = por %p248, %p249
      %s252 = sadd.s32 %s251, 1
      %p255 = scmp.eq.s32.totalorder %s44, 3
      %p256 = scmp.ne.s32.totalorder %s251, %s253
      %p257 = scmp.eq.s32.totalorder %s44, 0
      %p258 = por %p256, %p257
      %p259 = scmp.ne.s32.totalorder %s251, %s253
      %p260 = scmp.eq.s32.totalorder %s49, 3
      %p261 = por %p259, %p260
      %p262 = scmp.ne.s32.totalorder %s253, %s254
      %p263 = scmp.eq.s32.totalorder %s49, 0
      %p264 = por %p262, %p263
      %p265 = scmp.ne.s32.totalorder %s253, %s254
      %p266 = scmp.eq.s32.totalorder %s50, 3
      %p267 = por %p265, %p266
      %p269 = scmp.ne.s32.totalorder %s254, %s268
      %p270 = scmp.eq.s32.totalorder %s50, 0
      %p271 = por %p269, %p270
      %s273 = sadd.s32 %s272, 1
      %p276 = scmp.eq.s32.totalorder %s44, 3
      %p277 = scmp.ne.s32.totalorder %s272, %s274
      %p278 = scmp.eq.s32.totalorder %s44, 0
      %p279 = por %p277, %p278
      %p280 = scmp.ne.s32.totalorder %s272, %s274
      %p281 = scmp.eq.s32.totalorder %s49, 3
      %p282 = por %p280, %p281
      %p283 = scmp.ne.s32.totalorder %s274, %s275
      %p284 = scmp.eq.s32.totalorder %s49, 0
      %p285 = por %p283, %p284
      %p286 = scmp.ne.s32.totalorder %s274, %s275
      %p287 = scmp.eq.s32.totalorder %s50, 3
      %p288 = por %p286, %p287
      %p290 = scmp.ne.s32.totalorder %s275, %s289
      %p291 = scmp.eq.s32.totalorder %s50, 0
      %p292 = por %p290, %p291
      %s294 = sadd.s32 %s293, 1
      %p297 = scmp.eq.s32.totalorder %s44, 3
      %p298 = scmp.ne.s32.totalorder %s293, %s295
      %p299 = scmp.eq.s32.totalorder %s44, 0
      %p300 = por %p298, %p299
      %p301 = scmp.ne.s32.totalorder %s293, %s295
      %p302 = scmp.eq.s32.totalorder %s49, 3
      %p303 = por %p301, %p302
      %p304 = scmp.ne.s32.totalorder %s295, %s296
      %p305 = scmp.eq.s32.totalorder %s49, 0
      %p306 = por %p304, %p305
      %p307 = scmp.ne.s32.totalorder %s295, %s296
      %p308 = scmp.eq.s32.totalorder %s50, 3
      %p309 = por %p307, %p308
      %p311 = scmp.ne.s32.totalorder %s296, %s310
      %p312 = scmp.eq.s32.totalorder %s50, 0
      %p313 = por %p311, %p312
      %s315 = sadd.s32 %s314, 1
      %p318 = scmp.eq.s32.totalorder %s44, 3
      %p319 = scmp.ne.s32.totalorder %s314, %s316
      %p320 = scmp.eq.s32.totalorder %s44, 0
      %p321 = por %p319, %p320
      %p322 = scmp.ne.s32.totalorder %s314, %s316
      %p323 = scmp.eq.s32.totalorder %s49, 3
      %p324 = por %p322, %p323
      %p325 = scmp.ne.s32.totalorder %s316, %s317
      %p326 = scmp.eq.s32.totalorder %s49, 0
      %p327 = por %p325, %p326
      %p328 = scmp.ne.s32.totalorder %s316, %s317
      %p329 = scmp.eq.s32.totalorder %s50, 3
      %p330 = por %p328, %p329
      %p332 = scmp.ne.s32.totalorder %s317, %s331
      %p333 = scmp.eq.s32.totalorder %s50, 0
      %p334 = por %p332, %p333
      %s336 = sadd.s32 %s335, 1
      %p339 = scmp.eq.s32.totalorder %s44, 3
      %p340 = scmp.ne.s32.totalorder %s335, %s337
      %p341 = scmp.eq.s32.totalorder %s44, 0
      %p342 = por %p340, %p341
      %p343 = scmp.ne.s32.totalorder %s335, %s337
      %p344 = scmp.eq.s32.totalorder %s49, 3
      %p345 = por %p343, %p344
      %p346 = scmp.ne.s32.totalorder %s337, %s338
      %p347 = scmp.eq.s32.totalorder %s49, 0
      %p348 = por %p346, %p347
      %p349 = scmp.ne.s32.totalorder %s337, %s338
      %p350 = scmp.eq.s32.totalorder %s50, 3
      %p351 = por %p349, %p350
      %p353 = scmp.ne.s32.totalorder %s338, %s352
      %p354 = scmp.eq.s32.totalorder %s50, 0
      %p355 = por %p353, %p354
      %s357 = sadd.s32 %s356, 1
      %p360 = scmp.eq.s32.totalorder %s44, 3
      %p361 = scmp.ne.s32.totalorder %s356, %s358
      %p362 = scmp.eq.s32.totalorder %s44, 0
      %p363 = por %p361, %p362
      %p364 = scmp.ne.s32.totalorder %s356, %s358
      %p365 = scmp.eq.s32.totalorder %s49, 3
      %p366 = por %p364, %p365
      %p367 = scmp.ne.s32.totalorder %s358, %s359
      %p368 = scmp.eq.s32.totalorder %s49, 0
      %p369 = por %p367, %p368
      %p370 = scmp.ne.s32.totalorder %s358, %s359
      %p371 = scmp.eq.s32.totalorder %s50, 3
      %p372 = por %p370, %p371
      %p374 = scmp.ne.s32.totalorder %s359, %s373
      %p375 = scmp.eq.s32.totalorder %s50, 0
      %p376 = por %p374, %p375
      %s378 = sadd.s32 %s377, 1
      %p381 = scmp.eq.s32.totalorder %s44, 3
      %p382 = scmp.ne.s32.totalorder %s377, %s379
      %p383 = scmp.eq.s32.totalorder %s44, 0
      %p384 = por %p382, %p383
      %p385 = scmp.ne.s32.totalorder %s377, %s379
      %p386 = scmp.eq.s32.totalorder %s49, 3
      %p387 = por %p385, %p386
      %p388 = scmp.ne.s32.totalorder %s379, %s380
      %p389 = scmp.eq.s32.totalorder %s49, 0
      %p390 = por %p388, %p389
      %p391 = scmp.ne.s32.totalorder %s379, %s380
      %p392 = scmp.eq.s32.totalorder %s50, 3
      %p393 = por %p391, %p392
      %p395 = scmp.ne.s32.totalorder %s380, %s394
      %p396 = scmp.eq.s32.totalorder %s50, 0
      %p397 = por %p395, %p396
      %s399 = sadd.s32 %s398, 1
      %p402 = scmp.eq.s32.totalorder %s44, 3
      %p403 = scmp.ne.s32.totalorder %s398, %s400
      %p404 = scmp.eq.s32.totalorder %s44, 0
      %p405 = por %p403, %p404
      %p406 = scmp.ne.s32.totalorder %s398, %s400
      %p407 = scmp.eq.s32.totalorder %s49, 3
      %p408 = por %p406, %p407
      %p409 = scmp.ne.s32.totalorder %s400, %s401
      %p410 = scmp.eq.s32.totalorder %s49, 0
      %p411 = por %p409, %p410
      %p412 = scmp.ne.s32.totalorder %s400, %s401
      %p413 = scmp.eq.s32.totalorder %s50, 3
      %p414 = por %p412, %p413
      %p416 = scmp.ne.s32.totalorder %s401, %s415
      %p417 = scmp.eq.s32.totalorder %s50, 0
      %p418 = por %p416, %p417
      %s420 = sadd.s32 %s419, 1
      %p423 = scmp.eq.s32.totalorder %s44, 3
      %p424 = scmp.ne.s32.totalorder %s419, %s421
      %p425 = scmp.eq.s32.totalorder %s44, 0
      %p426 = por %p424, %p425
      %p427 = scmp.ne.s32.totalorder %s419, %s421
      %p428 = scmp.eq.s32.totalorder %s49, 3
      %p429 = por %p427, %p428
      %p430 = scmp.ne.s32.totalorder %s421, %s422
      %p431 = scmp.eq.s32.totalorder %s49, 0
      %p432 = por %p430, %p431
      %p433 = scmp.ne.s32.totalorder %s421, %s422
      %p434 = scmp.eq.s32.totalorder %s50, 3
      %p435 = por %p433, %p434
      %p437 = scmp.ne.s32.totalorder %s422, %s436
      %p438 = scmp.eq.s32.totalorder %s50, 0
      %p439 = por %p437, %p438
      %s441 = sadd.s32 %s440, 1
      %p444 = scmp.eq.s32.totalorder %s44, 3
      %p445 = scmp.ne.s32.totalorder %s440, %s442
      %p446 = scmp.eq.s32.totalorder %s44, 0
      %p447 = por %p445, %p446
      %p448 = scmp.ne.s32.totalorder %s440, %s442
      %p449 = scmp.eq.s32.totalorder %s49, 3
      %p450 = por %p448, %p449
      %p451 = scmp.ne.s32.totalorder %s442, %s443
      %p452 = scmp.eq.s32.totalorder %s49, 0
      %p453 = por %p451, %p452
      %p454 = scmp.ne.s32.totalorder %s442, %s443
      %p455 = scmp.eq.s32.totalorder %s50, 3
      %p456 = por %p454, %p455
      %p458 = scmp.ne.s32.totalorder %s443, %s457
      %p459 = scmp.eq.s32.totalorder %s50, 0
      %p460 = por %p458, %p459
      %s461 = ssub.s32 %s44, %s51
      %p462 = scmp.eq.s32.totalorder %s461, 0
      %s464 = sadd.s32 %s463, 1
      %s465 = scalar_select %p462, %s463, %s464
      %p468 = pneg %p462
      %p469 = scmp.eq.s32.totalorder %s44, 3
      %p470 = por %p468, %p469
      %p471 = scmp.ne.s32.totalorder %s463, %s466
      %p472 = scmp.eq.s32.totalorder %s44, 0
      %p473 = por %p471, %p472
      %p474 = scmp.ne.s32.totalorder %s463, %s466
      %p475 = scmp.eq.s32.totalorder %s49, 3
      %p476 = por %p474, %p475
      %p477 = scmp.ne.s32.totalorder %s466, %s467
      %p478 = scmp.eq.s32.totalorder %s49, 0
      %p479 = por %p477, %p478
      %p480 = scmp.ne.s32.totalorder %s466, %s467
      %p481 = scmp.eq.s32.totalorder %s50, 3
      %p482 = por %p480, %p481
      %p484 = scmp.ne.s32.totalorder %s467, %s483
      %p485 = scmp.eq.s32.totalorder %s50, 0
      %p486 = por %p484, %p485
      %s487 = ssub.s32 %s44, %s51
      %p488 = scmp.eq.s32.totalorder %s487, 0
      %s490 = sadd.s32 %s489, 1
      %s491 = scalar_select %p488, %s489, %s490
      %p494 = pneg %p488
      %p495 = scmp.eq.s32.totalorder %s44, 3
      %p496 = por %p494, %p495
      %p497 = scmp.ne.s32.totalorder %s489, %s492
      %p498 = scmp.eq.s32.totalorder %s44, 0
      %p499 = por %p497, %p498
      %p500 = scmp.ne.s32.totalorder %s489, %s492
      %p501 = scmp.eq.s32.totalorder %s49, 3
      %p502 = por %p500, %p501
      %p503 = scmp.ne.s32.totalorder %s492, %s493
      %p504 = scmp.eq.s32.totalorder %s49, 0
      %p505 = por %p503, %p504
      %p506 = scmp.ne.s32.totalorder %s492, %s493
      %p507 = scmp.eq.s32.totalorder %s50, 3
      %p508 = por %p506, %p507
      %p510 = scmp.ne.s32.totalorder %s493, %s509
      %p511 = scmp.eq.s32.totalorder %s50, 0
      %p512 = por %p510, %p511
      %s513 = ssub.s32 %s44, %s51
      %p514 = scmp.eq.s32.totalorder %s513, 0
      %s516 = sadd.s32 %s515, 1
      %s517 = scalar_select %p514, %s515, %s516
      %p520 = pneg %p514
      %p521 = scmp.eq.s32.totalorder %s44, 3
      %p522 = por %p520, %p521
      %p523 = scmp.ne.s32.totalorder %s515, %s518
      %p524 = scmp.eq.s32.totalorder %s44, 0
      %p525 = por %p523, %p524
      %p526 = scmp.ne.s32.totalorder %s515, %s518
      %p527 = scmp.eq.s32.totalorder %s49, 3
      %p528 = por %p526, %p527
      %p529 = scmp.ne.s32.totalorder %s518, %s519
      %p530 = scmp.eq.s32.totalorder %s49, 0
      %p531 = por %p529, %p530
      %p532 = scmp.ne.s32.totalorder %s518, %s519
      %p533 = scmp.eq.s32.totalorder %s50, 3
      %p534 = por %p532, %p533
      %p536 = scmp.ne.s32.totalorder %s519, %s535
      %p537 = scmp.eq.s32.totalorder %s50, 0
      %p538 = por %p536, %p537
      %p539 = scmp.le.s32.totalorder 1, %s44
      %p540 = scmp.lt.s32.totalorder %s44, 5
      %p541 = pnand %p539, %p540
      %p542 = pneg %p541
      // Predicated region
      $region9: #{tpu_custom_call.1} parent=5 // pred_check
        _
      $region10: #{tpu_custom_call.1} parent=5 // pred_check_branch
        %544 = sbr.rel (%p541) target = $region12
      $region11: #{tpu_custom_call.1} parent=5 // pred_region
        %s545 = ssub.s32 %s44, 1
        // Predicated region
        $region13: #{tpu_custom_call.1} parent=11 // pred_check
          %p546 = pneg %p117
        $region14: #{tpu_custom_call.1} parent=11 // pred_check_branch
          %548 = sbr.rel (%p546) target = $region16
        $region15: #{tpu_custom_call.1} parent=11 // pred_region
          %550 = vsyncadd [#allocation6], 0
          %s551 = sshll.u32 %s2, 4
          %s552 = int_to_ptr.hbm [resolvable:$true] %s551
          %s553 = sshll.u32 [#allocation7], 4
          %s554 = int_to_ptr.vmem [resolvable:$true] %s553
          %559 = dma.hbm_to_vmem [thread:$0]  %s552, 1024, %s554, [#allocation6], 64, 64, 4
        $region16: #{tpu_custom_call.1} parent=11 // pred_fallthru
          _
        // Predicated region
        $region17: #{tpu_custom_call.1} parent=11 // pred_check
          %p560 = pneg %p138
        $region18: #{tpu_custom_call.1} parent=11 // pred_check_branch
          %562 = sbr.rel (%p560) target = $region20
        $region19: #{tpu_custom_call.1} parent=11 // pred_region
          _
        $region20: #{tpu_custom_call.1} parent=11 // pred_fallthru
          _
        // Predicated region
        $region21: #{tpu_custom_call.1} parent=11 // pred_check
          %p563 = pneg %p159
        $region22: #{tpu_custom_call.1} parent=11 // pred_check_branch
          %565 = sbr.rel (%p563) target = $region24
        $region23: #{tpu_custom_call.1} parent=11 // pred_region
          %567 = vsyncadd [#allocation9], 0
          %s568 = sshll.u32 %s4, 4
          %s569 = int_to_ptr.hbm [resolvable:$true] %s568
          %s570 = sshll.u32 [#allocation8], 4
          %s571 = int_to_ptr.vmem [resolvable:$true] %s570
          %576 = dma.hbm_to_vmem [thread:$0]  %s569, 1024, %s571, [#allocation9], 64, 64, 4
        $region24: #{tpu_custom_call.1} parent=11 // pred_fallthru
          _
        // Predicated region
        $region25: #{tpu_custom_call.1} parent=11 // pred_check
          %p577 = pneg %p180
        $region26: #{tpu_custom_call.1} parent=11 // pred_check_branch
          %579 = sbr.rel (%p577) target = $region28
        $region27: #{tpu_custom_call.1} parent=11 // pred_region
          _
        $region28: #{tpu_custom_call.1} parent=11 // pred_fallthru
          _
        // Predicated region
        $region29: #{tpu_custom_call.1} parent=11 // pred_check
          %p580 = pneg %p201
        $region30: #{tpu_custom_call.1} parent=11 // pred_check_branch
          %582 = sbr.rel (%p580) target = $region32
        $region31: #{tpu_custom_call.1} parent=11 // pred_region
          %584 = vsyncadd [#allocation9], 0
          %s585 = sshll.u32 %s6, 4
          %s586 = int_to_ptr.hbm [resolvable:$true] %s585
          %s587 = sshll.u32 [#allocation10], 4
          %s588 = int_to_ptr.vmem [resolvable:$true] %s587
          %593 = dma.hbm_to_vmem [thread:$0]  %s586, 1024, %s588, [#allocation9], 64, 64, 4
        $region32: #{tpu_custom_call.1} parent=11 // pred_fallthru
          _
        // Predicated region
        $region33: #{tpu_custom_call.1} parent=11 // pred_check
          %p594 = pneg %p222
        $region34: #{tpu_custom_call.1} parent=11 // pred_check_branch
          %596 = sbr.rel (%p594) target = $region36
        $region35: #{tpu_custom_call.1} parent=11 // pred_region
          _
        $region36: #{tpu_custom_call.1} parent=11 // pred_fallthru
          _
        // Predicated region
        $region37: #{tpu_custom_call.1} parent=11 // pred_check
          %p597 = pneg %p243
        $region38: #{tpu_custom_call.1} parent=11 // pred_check_branch
          %599 = sbr.rel (%p597) target = $region40
        $region39: #{tpu_custom_call.1} parent=11 // pred_region
          %601 = vsyncadd [#allocation12], 0
          %s602 = sshll.u32 %s8, 4
          %s603 = int_to_ptr.hbm [resolvable:$true] %s602
          %s604 = sshll.u32 [#allocation11], 4
          %s605 = int_to_ptr.vmem [resolvable:$true] %s604
          %610 = dma.hbm_to_vmem [thread:$0]  %s603, 1024, %s605, [#allocation12], 64, 64, 4
        $region40: #{tpu_custom_call.1} parent=11 // pred_fallthru
          _
        // Predicated region
        $region41: #{tpu_custom_call.1} parent=11 // pred_check
          %p611 = pneg %p264
        $region42: #{tpu_custom_call.1} parent=11 // pred_check_branch
          %613 = sbr.rel (%p611) target = $region44
        $region43: #{tpu_custom_call.1} parent=11 // pred_region
          _
        $region44: #{tpu_custom_call.1} parent=11 // pred_fallthru
          _
        // Predicated region
        $region45: #{tpu_custom_call.1} parent=11 // pred_check
          %p614 = pneg %p285
        $region46: #{tpu_custom_call.1} parent=11 // pred_check_branch
          %616 = sbr.rel (%p614) target = $region48
        $region47: #{tpu_custom_call.1} parent=11 // pred_region
          %618 = vsyncadd [#allocation12], 0
          %s619 = sshll.u32 %s10, 4
          %s620 = int_to_ptr.hbm [resolvable:$true] %s619
          %s621 = sshll.u32 [#allocation13], 4
          %s622 = int_to_ptr.vmem [resolvable:$true] %s621
          %627 = dma.hbm_to_vmem [thread:$0]  %s620, 1024, %s622, [#allocation12], 64, 64, 4
        $region48: #{tpu_custom_call.1} parent=11 // pred_fallthru
          _
        // Predicated region
        $region49: #{tpu_custom_call.1} parent=11 // pred_check
          %p628 = pneg %p306
        $region50: #{tpu_custom_call.1} parent=11 // pred_check_branch
          %630 = sbr.rel (%p628) target = $region52
        $region51: #{tpu_custom_call.1} parent=11 // pred_region
          %632 = vsyncadd [#allocation15], 0
          %s633 = sshll.u32 %s11, 4
          %s634 = int_to_ptr.hbm [resolvable:$true] %s633
          %s635 = sshll.u32 [#allocation14], 4
          %s636 = int_to_ptr.vmem [resolvable:$true] %s635
          %641 = dma.hbm_to_vmem [thread:$0]  %s634, 1024, %s636, [#allocation15], 64, 64, 4
        $region52: #{tpu_custom_call.1} parent=11 // pred_fallthru
          _
        // Predicated region
        $region53: #{tpu_custom_call.1} parent=11 // pred_check
          %p642 = pneg %p327
        $region54: #{tpu_custom_call.1} parent=11 // pred_check_branch
          %644 = sbr.rel (%p642) target = $region56
        $region55: #{tpu_custom_call.1} parent=11 // pred_region
          _
        $region56: #{tpu_custom_call.1} parent=11 // pred_fallthru
          _
        // Predicated region
        $region57: #{tpu_custom_call.1} parent=11 // pred_check
          %p645 = pneg %p348
        $region58: #{tpu_custom_call.1} parent=11 // pred_check_branch
          %647 = sbr.rel (%p645) target = $region60
        $region59: #{tpu_custom_call.1} parent=11 // pred_region
          %649 = vsyncadd [#allocation15], 0
          %s650 = sshll.u32 %s13, 4
          %s651 = int_to_ptr.hbm [resolvable:$true] %s650
          %s652 = sshll.u32 [#allocation16], 4
          %s653 = int_to_ptr.vmem [resolvable:$true] %s652
          %658 = dma.hbm_to_vmem [thread:$0]  %s651, 1024, %s653, [#allocation15], 64, 64, 4
        $region60: #{tpu_custom_call.1} parent=11 // pred_fallthru
          _
        // Predicated region
        $region61: #{tpu_custom_call.1} parent=11 // pred_check
          %p659 = pneg %p369
        $region62: #{tpu_custom_call.1} parent=11 // pred_check_branch
          %661 = sbr.rel (%p659) target = $region64
        $region63: #{tpu_custom_call.1} parent=11 // pred_region
          _
        $region64: #{tpu_custom_call.1} parent=11 // pred_fallthru
          _
        // Predicated region
        $region65: #{tpu_custom_call.1} parent=11 // pred_check
          %p662 = pneg %p390
        $region66: #{tpu_custom_call.1} parent=11 // pred_check_branch
          %664 = sbr.rel (%p662) target = $region68
        $region67: #{tpu_custom_call.1} parent=11 // pred_region
          %666 = vsyncadd [#allocation18], 0
          %s667 = sshll.u32 %s15, 4
          %s668 = int_to_ptr.hbm [resolvable:$true] %s667
          %s669 = sshll.u32 [#allocation17], 4
          %s670 = int_to_ptr.vmem [resolvable:$true] %s669
          %675 = dma.hbm_to_vmem [thread:$0]  %s668, 1024, %s670, [#allocation18], 64, 64, 4
        $region68: #{tpu_custom_call.1} parent=11 // pred_fallthru
          _
        // Predicated region
        $region69: #{tpu_custom_call.1} parent=11 // pred_check
          %p676 = pneg %p411
        $region70: #{tpu_custom_call.1} parent=11 // pred_check_branch
          %678 = sbr.rel (%p676) target = $region72
        $region71: #{tpu_custom_call.1} parent=11 // pred_region
          _
        $region72: #{tpu_custom_call.1} parent=11 // pred_fallthru
          _
        // Predicated region
        $region73: #{tpu_custom_call.1} parent=11 // pred_check
          %p679 = pneg %p432
        $region74: #{tpu_custom_call.1} parent=11 // pred_check_branch
          %681 = sbr.rel (%p679) target = $region76
        $region75: #{tpu_custom_call.1} parent=11 // pred_region
          %683 = vsyncadd [#allocation18], 0
          %s684 = sshll.u32 %s17, 4
          %s685 = int_to_ptr.hbm [resolvable:$true] %s684
          %s686 = sshll.u32 [#allocation19], 4
          %s687 = int_to_ptr.vmem [resolvable:$true] %s686
          %692 = dma.hbm_to_vmem [thread:$0]  %s685, 1024, %s687, [#allocation18], 64, 64, 4
        $region76: #{tpu_custom_call.1} parent=11 // pred_fallthru
          _
        // Predicated region
        $region77: #{tpu_custom_call.1} parent=11 // pred_check
          %p693 = pneg %p453
        $region78: #{tpu_custom_call.1} parent=11 // pred_check_branch
          %695 = sbr.rel (%p693) target = $region80
        $region79: #{tpu_custom_call.1} parent=11 // pred_region
          _
        $region80: #{tpu_custom_call.1} parent=11 // pred_fallthru
          _
      $region12: #{tpu_custom_call.1} parent=5 // pred_fallthru
        _
      %p696 = scmp.lt.s32.totalorder %s44, 4
      // Predicated region
      $region81: #{tpu_custom_call.1} parent=5 // pred_check
        %p697 = pneg %p696
      $region82: #{tpu_custom_call.1} parent=5 // pred_check_branch
        %699 = sbr.rel (%p697) target = $region84
      $region83: #{tpu_custom_call.1} parent=5 // pred_region
        // Predicated region
        $region85: #{tpu_custom_call.1} parent=83 // pred_check
          %p700 = pneg %p64
        $region86: #{tpu_custom_call.1} parent=83 // pred_check_branch
          %702 = sbr.rel (%p700) target = $region88
        $region87: #{tpu_custom_call.1} parent=83 // pred_region
          %s703 = sand.u32 %s54, 1
          %s704 = scalar_lea.sflag [#allocation3], %s703
          %s705 = sand.u32 %s54, 1
          %s706 = smul.addr %s705, 8
          %s707 = scalar_lea.vmem [#allocation2], %s706
          %s708 = smul.u32 2, %s44
          %710 = vsyncadd %s704, 0
          %s711 = smul.addr %s708, 4
          %s712 = scalar_lea.hbm %s0, %s711
          %s713 = sshll.u32 %s712, 4
          %s714 = int_to_ptr.hbm [resolvable:$true] %s713
          %s715 = sshll.u32 %s707, 4
          %s716 = int_to_ptr.vmem [resolvable:$true] %s715
          %721 = dma.hbm_to_vmem [thread:$0]  %s714, 128, %s716, %s704, 64, 64, 4
        $region88: #{tpu_custom_call.1} parent=83 // pred_fallthru
          _
        // Predicated region
        $region89: #{tpu_custom_call.1} parent=83 // pred_check
          %p722 = pneg %p90
        $region90: #{tpu_custom_call.1} parent=83 // pred_check_branch
          %724 = sbr.rel (%p722) target = $region92
        $region91: #{tpu_custom_call.1} parent=83 // pred_region
          %s725 = sand.u32 %s44, 1
          %s726 = scalar_lea.sflag [#allocation6], %s725
          %s727 = sand.u32 %s80, 1
          %s728 = smul.addr %s727, 8
          %s729 = scalar_lea.vmem [#allocation5], %s728
          %s730 = smul.u32 2, %s44
          %732 = vsyncadd %s726, 0
          %s733 = smul.addr %s730, 4
          %s734 = scalar_lea.hbm %s1, %s733
          %s735 = sshll.u32 %s734, 4
          %s736 = int_to_ptr.hbm [resolvable:$true] %s735
          %s737 = sshll.u32 %s729, 4
          %s738 = int_to_ptr.vmem [resolvable:$true] %s737
          %743 = dma.hbm_to_vmem [thread:$0]  %s736, 128, %s738, %s726, 64, 64, 4
        $region92: #{tpu_custom_call.1} parent=83 // pred_fallthru
          _
      $region84: #{tpu_custom_call.1} parent=5 // pred_fallthru
        _
      %p744 = scmp.le.s32.totalorder 1, %s44
      %p745 = scmp.lt.s32.totalorder %s44, 5
      %p746 = pnand %p744, %p745
      %p747 = pneg %p746
      // Predicated region
      $region93: #{tpu_custom_call.1} parent=5 // pred_check
        _
      $region94: #{tpu_custom_call.1} parent=5 // pred_check_branch
        %749 = sbr.rel (%p746) target = $region96
      $region95: #{tpu_custom_call.1} parent=5 // pred_region
        %s750 = ssub.s32 %s44, 1
        %s751 = sand.u32 %s57, 1
        %s752 = scalar_lea.sflag [#allocation3], %s751
        %s753 = sand.u32 %s57, 1
        %s754 = smul.addr %s753, 8
        %s755 = scalar_lea.vmem [#allocation2], %s754
        // Predicated region
        $region97: #{tpu_custom_call.1} parent=95 // pred_check
          %p756 = pneg %p70
        $region98: #{tpu_custom_call.1} parent=95 // pred_check_branch
          %758 = sbr.rel (%p756) target = $region100
        $region99: #{tpu_custom_call.1} parent=95 // pred_region
          %760 = dma.done %s752, 128
        $region100: #{tpu_custom_call.1} parent=95 // pred_fallthru
          _
        %s761 = sand.u32 %s49, 1
        %s762 = scalar_lea.sflag [#allocation6], %s761
        %s763 = sand.u32 %s83, 1
        %s764 = smul.addr %s763, 8
        %s765 = scalar_lea.vmem [#allocation5], %s764
        // Predicated region
        $region101: #{tpu_custom_call.1} parent=95 // pred_check
          %p766 = pneg %p96
        $region102: #{tpu_custom_call.1} parent=95 // pred_check_branch
          %768 = sbr.rel (%p766) target = $region104
        $region103: #{tpu_custom_call.1} parent=95 // pred_region
          %770 = dma.done %s762, 128
        $region104: #{tpu_custom_call.1} parent=95 // pred_fallthru
          _
        // Predicated region
        $region105: #{tpu_custom_call.1} parent=95 // pred_check
          %p771 = pneg %p117
        $region106: #{tpu_custom_call.1} parent=95 // pred_check_branch
          %773 = sbr.rel (%p771) target = $region108
        $region107: #{tpu_custom_call.1} parent=95 // pred_region
          %775 = dma.done [#allocation6], 1024
        $region108: #{tpu_custom_call.1} parent=95 // pred_fallthru
          _
        // Predicated region
        $region109: #{tpu_custom_call.1} parent=95 // pred_check
          %p776 = pneg %p159
        $region110: #{tpu_custom_call.1} parent=95 // pred_check_branch
          %778 = sbr.rel (%p776) target = $region112
        $region111: #{tpu_custom_call.1} parent=95 // pred_region
          %780 = dma.done [#allocation9], 1024
        $region112: #{tpu_custom_call.1} parent=95 // pred_fallthru
          _
        // Predicated region
        $region113: #{tpu_custom_call.1} parent=95 // pred_check
          %p781 = pneg %p201
        $region114: #{tpu_custom_call.1} parent=95 // pred_check_branch
          %783 = sbr.rel (%p781) target = $region116
        $region115: #{tpu_custom_call.1} parent=95 // pred_region
          %785 = dma.done [#allocation9], 1024
        $region116: #{tpu_custom_call.1} parent=95 // pred_fallthru
          _
        // Predicated region
        $region117: #{tpu_custom_call.1} parent=95 // pred_check
          %p786 = pneg %p243
        $region118: #{tpu_custom_call.1} parent=95 // pred_check_branch
          %788 = sbr.rel (%p786) target = $region120
        $region119: #{tpu_custom_call.1} parent=95 // pred_region
          %790 = dma.done [#allocation12], 1024
        $region120: #{tpu_custom_call.1} parent=95 // pred_fallthru
          _
        // Predicated region
        $region121: #{tpu_custom_call.1} parent=95 // pred_check
          %p791 = pneg %p285
        $region122: #{tpu_custom_call.1} parent=95 // pred_check_branch
          %793 = sbr.rel (%p791) target = $region124
        $region123: #{tpu_custom_call.1} parent=95 // pred_region
          %795 = dma.done [#allocation12], 1024
        $region124: #{tpu_custom_call.1} parent=95 // pred_fallthru
          _
        // Predicated region
        $region125: #{tpu_custom_call.1} parent=95 // pred_check
          %p796 = pneg %p306
        $region126: #{tpu_custom_call.1} parent=95 // pred_check_branch
          %798 = sbr.rel (%p796) target = $region128
        $region127: #{tpu_custom_call.1} parent=95 // pred_region
          %800 = dma.done [#allocation15], 1024
        $region128: #{tpu_custom_call.1} parent=95 // pred_fallthru
          _
        // Predicated region
        $region129: #{tpu_custom_call.1} parent=95 // pred_check
          %p801 = pneg %p348
        $region130: #{tpu_custom_call.1} parent=95 // pred_check_branch
          %803 = sbr.rel (%p801) target = $region132
        $region131: #{tpu_custom_call.1} parent=95 // pred_region
          %805 = dma.done [#allocation15], 1024
        $region132: #{tpu_custom_call.1} parent=95 // pred_fallthru
          _
        // Predicated region
        $region133: #{tpu_custom_call.1} parent=95 // pred_check
          %p806 = pneg %p390
        $region134: #{tpu_custom_call.1} parent=95 // pred_check_branch
          %808 = sbr.rel (%p806) target = $region136
        $region135: #{tpu_custom_call.1} parent=95 // pred_region
          %810 = dma.done [#allocation18], 1024
        $region136: #{tpu_custom_call.1} parent=95 // pred_fallthru
          _
        // Predicated region
        $region137: #{tpu_custom_call.1} parent=95 // pred_check
          %p811 = pneg %p432
        $region138: #{tpu_custom_call.1} parent=95 // pred_check_branch
          %813 = sbr.rel (%p811) target = $region140
        $region139: #{tpu_custom_call.1} parent=95 // pred_region
          %815 = dma.done [#allocation18], 1024
        $region140: #{tpu_custom_call.1} parent=95 // pred_fallthru
          _
        %s816 = sand.u32 %s57, 1
        %s817 = scalar_lea.sflag [#allocation3], %s816
        %s818 = sand.u32 %s57, 1
        %s819 = smul.addr %s818, 8
        %s820 = scalar_lea.vmem [#allocation2], %s819
        %p821 = pneg %p70
        %p822 = pneg %p67
        %s823 = sand.u32 %s49, 1
        %s824 = scalar_lea.sflag [#allocation6], %s823
        %s825 = sand.u32 %s83, 1
        %s826 = smul.addr %s825, 8
        %s827 = scalar_lea.vmem [#allocation5], %s826
        %p828 = pneg %p96
        %p829 = pneg %p93
        %p830 = pneg %p117
        %p831 = pneg %p114
        %p832 = pneg %p138
        %p833 = pneg %p135
        %p834 = pneg %p159
        %p835 = pneg %p156
        %p836 = pneg %p180
        %p837 = pneg %p177
        %p838 = pneg %p201
        %p839 = pneg %p198
        %p840 = pneg %p222
        %p841 = pneg %p219
        %p842 = pneg %p243
        %p843 = pneg %p240
        %p844 = pneg %p264
        %p845 = pneg %p261
        %p846 = pneg %p285
        %p847 = pneg %p282
        %p848 = pneg %p306
        %p849 = pneg %p303
        %p850 = pneg %p327
        %p851 = pneg %p324
        %p852 = pneg %p348
        %p853 = pneg %p345
        %p854 = pneg %p369
        %p855 = pneg %p366
        %p856 = pneg %p390
        %p857 = pneg %p387
        %p858 = pneg %p411
        %p859 = pneg %p408
        %p860 = pneg %p432
        %p861 = pneg %p429
        %p862 = pneg %p453
        %p863 = pneg %p450
        %p864 = pneg %p479
        %p865 = pneg %p476
        %s866 = sand.u32 %s466, 1
        %s867 = scalar_lea.sflag [#allocation4], %s866
        %s868 = sand.u32 %s466, 1
        %s869 = smul.addr %s868, 8
        %s870 = scalar_lea.vmem [#allocation20], %s869
        %p871 = pneg %p505
        %p872 = pneg %p502
        %s873 = sand.u32 %s49, 1
        %s874 = scalar_lea.sflag [#allocation22], %s873
        %s875 = sand.u32 %s492, 1
        %s876 = scalar_lea.vmem [#allocation21], %s875
        %p877 = pneg %p531
        %p878 = pneg %p528
        %s879 = sand.u32 %s49, 1
        %s880 = scalar_lea.sflag [#allocation22], %s879
        %s881 = sand.u32 %s518, 1
        %s882 = scalar_lea.vmem [#allocation23], %s881
        %s883 = smul.u32 2, %s49
        %s884 = smul.u32 2, %s49
        %s885 = smul.u32 2, %s49
        %v886 = vld [vmem:[%s755] sm:$0xf]
        %v887 = vld [vmem:[%s755 + $0x4] sm:$0xf]
        %v888 = vld [vmem:[#allocation7] sm:$0xf]
        %v889 = vld [vmem:[#allocation7 + $0x4] sm:$0xf]
        %v890 = vld [vmem:[#allocation7 + $0x8] sm:$0xf]
        %v891 = vld [vmem:[#allocation7 + $0xc] sm:$0xf]
        %v892 = vld [vmem:[#allocation7 + $0x10] sm:$0xf]
        %v893 = vld [vmem:[#allocation7 + $0x14] sm:$0xf]
        %v894 = vld [vmem:[#allocation7 + $0x18] sm:$0xf]
        %v895 = vld [vmem:[#allocation7 + $0x1c] sm:$0xf]
        %v896 = vld [vmem:[#allocation7 + $0x20] sm:$0xf]
        %v897 = vld [vmem:[#allocation7 + $0x24] sm:$0xf]
        %v898 = vld [vmem:[#allocation7 + $0x28] sm:$0xf]
        %v899 = vld [vmem:[#allocation7 + $0x2c] sm:$0xf]
        %v900 = vld [vmem:[#allocation7 + $0x30] sm:$0xf]
        %v901 = vld [vmem:[#allocation7 + $0x34] sm:$0xf]
        %v902 = vld [vmem:[#allocation7 + $0x38] sm:$0xf]
        %v903 = vld [vmem:[#allocation7 + $0x3c] sm:$0xf]
        %v904 = vld [vmem:[%s3] sm:$0x1]
        %v906 = vperm.slane %v904, 0
        %v910 = vunpack.c.l.b16 %v886
        %v911 = vunpack.c.l.b16 %v887
        %v912 = vpack.c.b16 %v911, %v910
        %v930 = vunpack.c.l.b16 %v888
        %v931 = vunpack.c.l.b16 %v889
        %v932 = vunpack.c.l.b16 %v890
        %v933 = vunpack.c.l.b16 %v891
        %v934 = vunpack.c.l.b16 %v892
        %v935 = vunpack.c.l.b16 %v893
        %v936 = vunpack.c.l.b16 %v894
        %v937 = vunpack.c.l.b16 %v895
        %v938 = vunpack.c.l.b16 %v896
        %v939 = vunpack.c.l.b16 %v897
        %v940 = vunpack.c.l.b16 %v898
        %v941 = vunpack.c.l.b16 %v899
        %v942 = vunpack.c.l.b16 %v900
        %v943 = vunpack.c.l.b16 %v901
        %v944 = vunpack.c.l.b16 %v902
        %v945 = vunpack.c.l.b16 %v903
        %v946 = vpack.c.b16 %v931, %v930
        %v947 = vpack.c.b16 %v933, %v932
        %v948 = vpack.c.b16 %v935, %v934
        %v949 = vpack.c.b16 %v937, %v936
        %v950 = vpack.c.b16 %v939, %v938
        %v951 = vpack.c.b16 %v941, %v940
        %v952 = vpack.c.b16 %v943, %v942
        %v953 = vpack.c.b16 %v945, %v944
        %962 = vmatpush.bf16.msra.mxu0 %v953
        %963 = vmatpush.bf16.msra.mxu0 %v952
        %964 = vmatpush.bf16.msra.mxu0 %v951
        %965 = vmatpush.bf16.msra.mxu0 %v950
        %966 = vmatpush.bf16.msra.mxu0 %v949
        %967 = vmatpush.bf16.msra.mxu0 %v948
        %968 = vmatpush.bf16.msra.mxu0 %v947
        %969 = vmatpush.bf16.msra.mxu0 %v946
        %970 = vmatmul.bf16.gmra.mxu0 %v912
        %v971 = vpop.f32.mrf.mxu0
        %v972 = vadd.f32 %v906, %v971
        %v973 = vpop.f32.mrf.mxu0
        %v974 = vadd.f32 %v906, %v973
        %975 = vdwg.mxu0
        %v976 = vtanh.pop %v972
        %v977 = vtanh.pop %v974
        %v978 = vpack.c.bf16 %v977, %v976
        %v979 = vld [vmem:[#allocation8] sm:$0xf]
        %v980 = vld [vmem:[#allocation8 + $0x4] sm:$0xf]
        %v981 = vld [vmem:[#allocation8 + $0x8] sm:$0xf]
        %v982 = vld [vmem:[#allocation8 + $0xc] sm:$0xf]
        %v983 = vld [vmem:[#allocation8 + $0x10] sm:$0xf]
        %v984 = vld [vmem:[#allocation8 + $0x14] sm:$0xf]
        %v985 = vld [vmem:[#allocation8 + $0x18] sm:$0xf]
        %v986 = vld [vmem:[#allocation8 + $0x1c] sm:$0xf]
        %v987 = vld [vmem:[#allocation8 + $0x20] sm:$0xf]
        %v988 = vld [vmem:[#allocation8 + $0x24] sm:$0xf]
        %v989 = vld [vmem:[#allocation8 + $0x28] sm:$0xf]
        %v990 = vld [vmem:[#allocation8 + $0x2c] sm:$0xf]
        %v991 = vld [vmem:[#allocation8 + $0x30] sm:$0xf]
        %v992 = vld [vmem:[#allocation8 + $0x34] sm:$0xf]
        %v993 = vld [vmem:[#allocation8 + $0x38] sm:$0xf]
        %v994 = vld [vmem:[#allocation8 + $0x3c] sm:$0xf]
        %v995 = vld [vmem:[%s5] sm:$0x1]
        %v997 = vperm.slane %v995, 0
        %v1015 = vunpack.c.l.b16 %v979
        %v1016 = vunpack.c.l.b16 %v980
        %v1017 = vunpack.c.l.b16 %v981
        %v1018 = vunpack.c.l.b16 %v982
        %v1019 = vunpack.c.l.b16 %v983
        %v1020 = vunpack.c.l.b16 %v984
        %v1021 = vunpack.c.l.b16 %v985
        %v1022 = vunpack.c.l.b16 %v986
        %v1023 = vunpack.c.l.b16 %v987
        %v1024 = vunpack.c.l.b16 %v988
        %v1025 = vunpack.c.l.b16 %v989
        %v1026 = vunpack.c.l.b16 %v990
        %v1027 = vunpack.c.l.b16 %v991
        %v1028 = vunpack.c.l.b16 %v992
        %v1029 = vunpack.c.l.b16 %v993
        %v1030 = vunpack.c.l.b16 %v994
        %v1031 = vpack.c.b16 %v1016, %v1015
        %v1032 = vpack.c.b16 %v1018, %v1017
        %v1033 = vpack.c.b16 %v1020, %v1019
        %v1034 = vpack.c.b16 %v1022, %v1021
        %v1035 = vpack.c.b16 %v1024, %v1023
        %v1036 = vpack.c.b16 %v1026, %v1025
        %v1037 = vpack.c.b16 %v1028, %v1027
        %v1038 = vpack.c.b16 %v1030, %v1029
        %1047 = vmatpush.bf16.msra.mxu0 %v1038
        %1048 = vmatpush.bf16.msra.mxu0 %v1037
        %1049 = vmatpush.bf16.msra.mxu0 %v1036
        %1050 = vmatpush.bf16.msra.mxu0 %v1035
        %1051 = vmatpush.bf16.msra.mxu0 %v1034
        %1052 = vmatpush.bf16.msra.mxu0 %v1033
        %1053 = vmatpush.bf16.msra.mxu0 %v1032
        %1054 = vmatpush.bf16.msra.mxu0 %v1031
        %1055 = vmatmul.bf16.gmra.mxu0 %v978
        %v1056 = vpop.f32.mrf.mxu0
        %v1057 = vadd.f32 %v997, %v1056
        %v1058 = vpop.f32.mrf.mxu0
        %v1059 = vadd.f32 %v997, %v1058
        %1060 = vdwg.mxu0
        %v1061 = vtanh.pop %v1057
        %v1062 = vtanh.pop %v1059
        %v1063 = vpack.c.bf16 %v1062, %v1061
        %v1064 = vld [vmem:[#allocation10] sm:$0xf]
        %v1065 = vld [vmem:[#allocation10 + $0x4] sm:$0xf]
        %v1066 = vld [vmem:[#allocation10 + $0x8] sm:$0xf]
        %v1067 = vld [vmem:[#allocation10 + $0xc] sm:$0xf]
        %v1068 = vld [vmem:[#allocation10 + $0x10] sm:$0xf]
        %v1069 = vld [vmem:[#allocation10 + $0x14] sm:$0xf]
        %v1070 = vld [vmem:[#allocation10 + $0x18] sm:$0xf]
        %v1071 = vld [vmem:[#allocation10 + $0x1c] sm:$0xf]
        %v1072 = vld [vmem:[#allocation10 + $0x20] sm:$0xf]
        %v1073 = vld [vmem:[#allocation10 + $0x24] sm:$0xf]
        %v1074 = vld [vmem:[#allocation10 + $0x28] sm:$0xf]
        %v1075 = vld [vmem:[#allocation10 + $0x2c] sm:$0xf]
        %v1076 = vld [vmem:[#allocation10 + $0x30] sm:$0xf]
        %v1077 = vld [vmem:[#allocation10 + $0x34] sm:$0xf]
        %v1078 = vld [vmem:[#allocation10 + $0x38] sm:$0xf]
        %v1079 = vld [vmem:[#allocation10 + $0x3c] sm:$0xf]
        %v1080 = vld [vmem:[%s7] sm:$0x1]
        %v1082 = vperm.slane %v1080, 0
        %v1100 = vunpack.c.l.b16 %v1064
        %v1101 = vunpack.c.l.b16 %v1065
        %v1102 = vunpack.c.l.b16 %v1066
        %v1103 = vunpack.c.l.b16 %v1067
        %v1104 = vunpack.c.l.b16 %v1068
        %v1105 = vunpack.c.l.b16 %v1069
        %v1106 = vunpack.c.l.b16 %v1070
        %v1107 = vunpack.c.l.b16 %v1071
        %v1108 = vunpack.c.l.b16 %v1072
        %v1109 = vunpack.c.l.b16 %v1073
        %v1110 = vunpack.c.l.b16 %v1074
        %v1111 = vunpack.c.l.b16 %v1075
        %v1112 = vunpack.c.l.b16 %v1076
        %v1113 = vunpack.c.l.b16 %v1077
        %v1114 = vunpack.c.l.b16 %v1078
        %v1115 = vunpack.c.l.b16 %v1079
        %v1116 = vpack.c.b16 %v1101, %v1100
        %v1117 = vpack.c.b16 %v1103, %v1102
        %v1118 = vpack.c.b16 %v1105, %v1104
        %v1119 = vpack.c.b16 %v1107, %v1106
        %v1120 = vpack.c.b16 %v1109, %v1108
        %v1121 = vpack.c.b16 %v1111, %v1110
        %v1122 = vpack.c.b16 %v1113, %v1112
        %v1123 = vpack.c.b16 %v1115, %v1114
        %1132 = vmatpush.bf16.msra.mxu0 %v1123
        %1133 = vmatpush.bf16.msra.mxu0 %v1122
        %1134 = vmatpush.bf16.msra.mxu0 %v1121
        %1135 = vmatpush.bf16.msra.mxu0 %v1120
        %1136 = vmatpush.bf16.msra.mxu0 %v1119
        %1137 = vmatpush.bf16.msra.mxu0 %v1118
        %1138 = vmatpush.bf16.msra.mxu0 %v1117
        %1139 = vmatpush.bf16.msra.mxu0 %v1116
        %1140 = vmatmul.bf16.gmra.mxu0 %v1063
        %v1141 = vpop.f32.mrf.mxu0
        %v1142 = vadd.f32 %v1082, %v1141
        %v1143 = vpop.f32.mrf.mxu0
        %v1144 = vadd.f32 %v1082, %v1143
        %1145 = vdwg.mxu0
        %v1146 = vtanh.pop %v1142
        %v1147 = vtanh.pop %v1144
        %v1148 = vpack.c.bf16 %v1147, %v1146
        %v1149 = vld [vmem:[#allocation11] sm:$0xf]
        %v1150 = vld [vmem:[#allocation11 + $0x4] sm:$0xf]
        %v1151 = vld [vmem:[#allocation11 + $0x8] sm:$0xf]
        %v1152 = vld [vmem:[#allocation11 + $0xc] sm:$0xf]
        %v1153 = vld [vmem:[#allocation11 + $0x10] sm:$0xf]
        %v1154 = vld [vmem:[#allocation11 + $0x14] sm:$0xf]
        %v1155 = vld [vmem:[#allocation11 + $0x18] sm:$0xf]
        %v1156 = vld [vmem:[#allocation11 + $0x1c] sm:$0xf]
        %v1157 = vld [vmem:[#allocation11 + $0x20] sm:$0xf]
        %v1158 = vld [vmem:[#allocation11 + $0x24] sm:$0xf]
        %v1159 = vld [vmem:[#allocation11 + $0x28] sm:$0xf]
        %v1160 = vld [vmem:[#allocation11 + $0x2c] sm:$0xf]
        %v1161 = vld [vmem:[#allocation11 + $0x30] sm:$0xf]
        %v1162 = vld [vmem:[#allocation11 + $0x34] sm:$0xf]
        %v1163 = vld [vmem:[#allocation11 + $0x38] sm:$0xf]
        %v1164 = vld [vmem:[#allocation11 + $0x3c] sm:$0xf]
        %v1165 = vld [vmem:[%s9] sm:$0x1]
        %v1167 = vperm.slane %v1165, 0
        %v1185 = vunpack.c.l.b16 %v1149
        %v1186 = vunpack.c.l.b16 %v1150
        %v1187 = vunpack.c.l.b16 %v1151
        %v1188 = vunpack.c.l.b16 %v1152
        %v1189 = vunpack.c.l.b16 %v1153
        %v1190 = vunpack.c.l.b16 %v1154
        %v1191 = vunpack.c.l.b16 %v1155
        %v1192 = vunpack.c.l.b16 %v1156
        %v1193 = vunpack.c.l.b16 %v1157
        %v1194 = vunpack.c.l.b16 %v1158
        %v1195 = vunpack.c.l.b16 %v1159
        %v1196 = vunpack.c.l.b16 %v1160
        %v1197 = vunpack.c.l.b16 %v1161
        %v1198 = vunpack.c.l.b16 %v1162
        %v1199 = vunpack.c.l.b16 %v1163
        %v1200 = vunpack.c.l.b16 %v1164
        %v1201 = vpack.c.b16 %v1186, %v1185
        %v1202 = vpack.c.b16 %v1188, %v1187
        %v1203 = vpack.c.b16 %v1190, %v1189
        %v1204 = vpack.c.b16 %v1192, %v1191
        %v1205 = vpack.c.b16 %v1194, %v1193
        %v1206 = vpack.c.b16 %v1196, %v1195
        %v1207 = vpack.c.b16 %v1198, %v1197
        %v1208 = vpack.c.b16 %v1200, %v1199
        %1217 = vmatpush.bf16.msra.mxu0 %v1208
        %1218 = vmatpush.bf16.msra.mxu0 %v1207
        %1219 = vmatpush.bf16.msra.mxu0 %v1206
        %1220 = vmatpush.bf16.msra.mxu0 %v1205
        %1221 = vmatpush.bf16.msra.mxu0 %v1204
        %1222 = vmatpush.bf16.msra.mxu0 %v1203
        %1223 = vmatpush.bf16.msra.mxu0 %v1202
        %1224 = vmatpush.bf16.msra.mxu0 %v1201
        %1225 = vmatmul.bf16.gmra.mxu0 %v1148
        %v1226 = vpop.f32.mrf.mxu0
        %v1227 = vadd.f32 %v1167, %v1226
        %v1228 = vpop.f32.mrf.mxu0
        %v1229 = vadd.f32 %v1167, %v1228
        %1230 = vdwg.mxu0
        %v1231 = vtanh.pop %v1227
        %v1232 = vtanh.pop %v1229
        %v1233 = vpack.c.bf16 %v1232, %v1231
        %v1234 = vld [vmem:[#allocation13] sm:$0xf]
        %v1235 = vld [vmem:[#allocation13 + $0x4] sm:$0xf]
        %v1236 = vld [vmem:[#allocation13 + $0x8] sm:$0xf]
        %v1237 = vld [vmem:[#allocation13 + $0xc] sm:$0xf]
        %v1238 = vld [vmem:[#allocation13 + $0x10] sm:$0xf]
        %v1239 = vld [vmem:[#allocation13 + $0x14] sm:$0xf]
        %v1240 = vld [vmem:[#allocation13 + $0x18] sm:$0xf]
        %v1241 = vld [vmem:[#allocation13 + $0x1c] sm:$0xf]
        %v1242 = vld [vmem:[#allocation13 + $0x20] sm:$0xf]
        %v1243 = vld [vmem:[#allocation13 + $0x24] sm:$0xf]
        %v1244 = vld [vmem:[#allocation13 + $0x28] sm:$0xf]
        %v1245 = vld [vmem:[#allocation13 + $0x2c] sm:$0xf]
        %v1246 = vld [vmem:[#allocation13 + $0x30] sm:$0xf]
        %v1247 = vld [vmem:[#allocation13 + $0x34] sm:$0xf]
        %v1248 = vld [vmem:[#allocation13 + $0x38] sm:$0xf]
        %v1249 = vld [vmem:[#allocation13 + $0x3c] sm:$0xf]
        %v1266 = vunpack.c.l.b16 %v1234
        %v1267 = vunpack.c.l.b16 %v1235
        %v1268 = vunpack.c.l.b16 %v1236
        %v1269 = vunpack.c.l.b16 %v1237
        %v1270 = vunpack.c.l.b16 %v1238
        %v1271 = vunpack.c.l.b16 %v1239
        %v1272 = vunpack.c.l.b16 %v1240
        %v1273 = vunpack.c.l.b16 %v1241
        %v1274 = vunpack.c.l.b16 %v1242
        %v1275 = vunpack.c.l.b16 %v1243
        %v1276 = vunpack.c.l.b16 %v1244
        %v1277 = vunpack.c.l.b16 %v1245
        %v1278 = vunpack.c.l.b16 %v1246
        %v1279 = vunpack.c.l.b16 %v1247
        %v1280 = vunpack.c.l.b16 %v1248
        %v1281 = vunpack.c.l.b16 %v1249
        %v1282 = vpack.c.b16 %v1267, %v1266
        %v1283 = vpack.c.b16 %v1269, %v1268
        %v1284 = vpack.c.b16 %v1271, %v1270
        %v1285 = vpack.c.b16 %v1273, %v1272
        %v1286 = vpack.c.b16 %v1275, %v1274
        %v1287 = vpack.c.b16 %v1277, %v1276
        %v1288 = vpack.c.b16 %v1279, %v1278
        %v1289 = vpack.c.b16 %v1281, %v1280
        %1298 = vmatpush.bf16.msra.mxu0 %v1289
        %1299 = vmatpush.bf16.msra.mxu0 %v1288
        %1300 = vmatpush.bf16.msra.mxu0 %v1287
        %1301 = vmatpush.bf16.msra.mxu0 %v1286
        %1302 = vmatpush.bf16.msra.mxu0 %v1285
        %1303 = vmatpush.bf16.msra.mxu0 %v1284
        %1304 = vmatpush.bf16.msra.mxu0 %v1283
        %1305 = vmatpush.bf16.msra.mxu0 %v1282
        %1306 = vmatmul.bf16.gmra.mxu0 %v1233
        %v1307 = vpop.f32.mrf.mxu0
        %v1308 = vadd.f32 0.0, %v1307
        %v1309 = vpop.f32.mrf.mxu0
        %v1310 = vadd.f32 0.0, %v1309
        %1311 = vdwg.mxu0
        %v1312 = vld [vmem:[%s765] sm:$0xf]
        %v1313 = vld [vmem:[%s765 + $0x4] sm:$0xf]
        %v1314 = vunpack.c.l.bf16 %v1312
        %v1315 = vunpack.c.l.bf16 %v1313
        %v1316 = vmul.f32 %v1308, %v1314
        %v1317 = vmul.f32 %v1310, %v1315
        %v1318 = vpack.c.bf16 %v1317, %v1316
        %v1319 = vld [vmem:[#allocation14] sm:$0xf]
        %v1320 = vld [vmem:[#allocation14 + $0x4] sm:$0xf]
        %v1321 = vld [vmem:[#allocation14 + $0x8] sm:$0xf]
        %v1322 = vld [vmem:[#allocation14 + $0xc] sm:$0xf]
        %v1323 = vld [vmem:[#allocation14 + $0x10] sm:$0xf]
        %v1324 = vld [vmem:[#allocation14 + $0x14] sm:$0xf]
        %v1325 = vld [vmem:[#allocation14 + $0x18] sm:$0xf]
        %v1326 = vld [vmem:[#allocation14 + $0x1c] sm:$0xf]
        %v1327 = vld [vmem:[#allocation14 + $0x20] sm:$0xf]
        %v1328 = vld [vmem:[#allocation14 + $0x24] sm:$0xf]
        %v1329 = vld [vmem:[#allocation14 + $0x28] sm:$0xf]
        %v1330 = vld [vmem:[#allocation14 + $0x2c] sm:$0xf]
        %v1331 = vld [vmem:[#allocation14 + $0x30] sm:$0xf]
        %v1332 = vld [vmem:[#allocation14 + $0x34] sm:$0xf]
        %v1333 = vld [vmem:[#allocation14 + $0x38] sm:$0xf]
        %v1334 = vld [vmem:[#allocation14 + $0x3c] sm:$0xf]
        %v1335 = vld [vmem:[%s12] sm:$0x1]
        %v1337 = vperm.slane %v1335, 0
        %v1355 = vunpack.c.l.b16 %v1319
        %v1356 = vunpack.c.l.b16 %v1320
        %v1357 = vunpack.c.l.b16 %v1321
        %v1358 = vunpack.c.l.b16 %v1322
        %v1359 = vunpack.c.l.b16 %v1323
        %v1360 = vunpack.c.l.b16 %v1324
        %v1361 = vunpack.c.l.b16 %v1325
        %v1362 = vunpack.c.l.b16 %v1326
        %v1363 = vunpack.c.l.b16 %v1327
        %v1364 = vunpack.c.l.b16 %v1328
        %v1365 = vunpack.c.l.b16 %v1329
        %v1366 = vunpack.c.l.b16 %v1330
        %v1367 = vunpack.c.l.b16 %v1331
        %v1368 = vunpack.c.l.b16 %v1332
        %v1369 = vunpack.c.l.b16 %v1333
        %v1370 = vunpack.c.l.b16 %v1334
        %v1371 = vpack.c.b16 %v1356, %v1355
        %v1372 = vpack.c.b16 %v1358, %v1357
        %v1373 = vpack.c.b16 %v1360, %v1359
        %v1374 = vpack.c.b16 %v1362, %v1361
        %v1375 = vpack.c.b16 %v1364, %v1363
        %v1376 = vpack.c.b16 %v1366, %v1365
        %v1377 = vpack.c.b16 %v1368, %v1367
        %v1378 = vpack.c.b16 %v1370, %v1369
        %1387 = vmatpush.bf16.msra.mxu0 %v1378
        %1388 = vmatpush.bf16.msra.mxu0 %v1377
        %1389 = vmatpush.bf16.msra.mxu0 %v1376
        %1390 = vmatpush.bf16.msra.mxu0 %v1375
        %1391 = vmatpush.bf16.msra.mxu0 %v1374
        %1392 = vmatpush.bf16.msra.mxu0 %v1373
        %1393 = vmatpush.bf16.msra.mxu0 %v1372
        %1394 = vmatpush.bf16.msra.mxu0 %v1371
        %1395 = vmatmul.bf16.gmra.mxu0 %v1318
        %v1396 = vpop.f32.mrf.mxu0
        %v1397 = vadd.f32 %v1337, %v1396
        %v1398 = vpop.f32.mrf.mxu0
        %v1399 = vadd.f32 %v1337, %v1398
        %1400 = vdwg.mxu0
        %v1401 = vtanh.pop %v1397
        %v1402 = vtanh.pop %v1399
        %v1403 = vpack.c.bf16 %v1402, %v1401
        %v1404 = vld [vmem:[#allocation16] sm:$0xf]
        %v1405 = vld [vmem:[#allocation16 + $0x4] sm:$0xf]
        %v1406 = vld [vmem:[#allocation16 + $0x8] sm:$0xf]
        %v1407 = vld [vmem:[#allocation16 + $0xc] sm:$0xf]
        %v1408 = vld [vmem:[#allocation16 + $0x10] sm:$0xf]
        %v1409 = vld [vmem:[#allocation16 + $0x14] sm:$0xf]
        %v1410 = vld [vmem:[#allocation16 + $0x18] sm:$0xf]
        %v1411 = vld [vmem:[#allocation16 + $0x1c] sm:$0xf]
        %v1412 = vld [vmem:[#allocation16 + $0x20] sm:$0xf]
        %v1413 = vld [vmem:[#allocation16 + $0x24] sm:$0xf]
        %v1414 = vld [vmem:[#allocation16 + $0x28] sm:$0xf]
        %v1415 = vld [vmem:[#allocation16 + $0x2c] sm:$0xf]
        %v1416 = vld [vmem:[#allocation16 + $0x30] sm:$0xf]
        %v1417 = vld [vmem:[#allocation16 + $0x34] sm:$0xf]
        %v1418 = vld [vmem:[#allocation16 + $0x38] sm:$0xf]
        %v1419 = vld [vmem:[#allocation16 + $0x3c] sm:$0xf]
        %v1420 = vld [vmem:[%s14] sm:$0x1]
        %v1422 = vperm.slane %v1420, 0
        %v1440 = vunpack.c.l.b16 %v1404
        %v1441 = vunpack.c.l.b16 %v1405
        %v1442 = vunpack.c.l.b16 %v1406
        %v1443 = vunpack.c.l.b16 %v1407
        %v1444 = vunpack.c.l.b16 %v1408
        %v1445 = vunpack.c.l.b16 %v1409
        %v1446 = vunpack.c.l.b16 %v1410
        %v1447 = vunpack.c.l.b16 %v1411
        %v1448 = vunpack.c.l.b16 %v1412
        %v1449 = vunpack.c.l.b16 %v1413
        %v1450 = vunpack.c.l.b16 %v1414
        %v1451 = vunpack.c.l.b16 %v1415
        %v1452 = vunpack.c.l.b16 %v1416
        %v1453 = vunpack.c.l.b16 %v1417
        %v1454 = vunpack.c.l.b16 %v1418
        %v1455 = vunpack.c.l.b16 %v1419
        %v1456 = vpack.c.b16 %v1441, %v1440
        %v1457 = vpack.c.b16 %v1443, %v1442
        %v1458 = vpack.c.b16 %v1445, %v1444
        %v1459 = vpack.c.b16 %v1447, %v1446
        %v1460 = vpack.c.b16 %v1449, %v1448
        %v1461 = vpack.c.b16 %v1451, %v1450
        %v1462 = vpack.c.b16 %v1453, %v1452
        %v1463 = vpack.c.b16 %v1455, %v1454
        %1472 = vmatpush.bf16.msra.mxu0 %v1463
        %1473 = vmatpush.bf16.msra.mxu0 %v1462
        %1474 = vmatpush.bf16.msra.mxu0 %v1461
        %1475 = vmatpush.bf16.msra.mxu0 %v1460
        %1476 = vmatpush.bf16.msra.mxu0 %v1459
        %1477 = vmatpush.bf16.msra.mxu0 %v1458
        %1478 = vmatpush.bf16.msra.mxu0 %v1457
        %1479 = vmatpush.bf16.msra.mxu0 %v1456
        %1480 = vmatmul.bf16.gmra.mxu0 %v1403
        %v1481 = vpop.f32.mrf.mxu0
        %v1482 = vadd.f32 %v1422, %v1481
        %v1483 = vpop.f32.mrf.mxu0
        %v1484 = vadd.f32 %v1422, %v1483
        %1485 = vdwg.mxu0
        %v1486 = vtanh.pop %v1482
        %v1487 = vtanh.pop %v1484
        %v1488 = vpack.c.bf16 %v1487, %v1486
        %v1489 = vld [vmem:[#allocation17] sm:$0xf]
        %v1490 = vld [vmem:[#allocation17 + $0x4] sm:$0xf]
        %v1491 = vld [vmem:[#allocation17 + $0x8] sm:$0xf]
        %v1492 = vld [vmem:[#allocation17 + $0xc] sm:$0xf]
        %v1493 = vld [vmem:[#allocation17 + $0x10] sm:$0xf]
        %v1494 = vld [vmem:[#allocation17 + $0x14] sm:$0xf]
        %v1495 = vld [vmem:[#allocation17 + $0x18] sm:$0xf]
        %v1496 = vld [vmem:[#allocation17 + $0x1c] sm:$0xf]
        %v1497 = vld [vmem:[#allocation17 + $0x20] sm:$0xf]
        %v1498 = vld [vmem:[#allocation17 + $0x24] sm:$0xf]
        %v1499 = vld [vmem:[#allocation17 + $0x28] sm:$0xf]
        %v1500 = vld [vmem:[#allocation17 + $0x2c] sm:$0xf]
        %v1501 = vld [vmem:[#allocation17 + $0x30] sm:$0xf]
        %v1502 = vld [vmem:[#allocation17 + $0x34] sm:$0xf]
        %v1503 = vld [vmem:[#allocation17 + $0x38] sm:$0xf]
        %v1504 = vld [vmem:[#allocation17 + $0x3c] sm:$0xf]
        %v1505 = vld [vmem:[%s16] sm:$0x1]
        %v1507 = vperm.slane %v1505, 0
        %v1525 = vunpack.c.l.b16 %v1489
        %v1526 = vunpack.c.l.b16 %v1490
        %v1527 = vunpack.c.l.b16 %v1491
        %v1528 = vunpack.c.l.b16 %v1492
        %v1529 = vunpack.c.l.b16 %v1493
        %v1530 = vunpack.c.l.b16 %v1494
        %v1531 = vunpack.c.l.b16 %v1495
        %v1532 = vunpack.c.l.b16 %v1496
        %v1533 = vunpack.c.l.b16 %v1497
        %v1534 = vunpack.c.l.b16 %v1498
        %v1535 = vunpack.c.l.b16 %v1499
        %v1536 = vunpack.c.l.b16 %v1500
        %v1537 = vunpack.c.l.b16 %v1501
        %v1538 = vunpack.c.l.b16 %v1502
        %v1539 = vunpack.c.l.b16 %v1503
        %v1540 = vunpack.c.l.b16 %v1504
        %v1541 = vpack.c.b16 %v1526, %v1525
        %v1542 = vpack.c.b16 %v1528, %v1527
        %v1543 = vpack.c.b16 %v1530, %v1529
        %v1544 = vpack.c.b16 %v1532, %v1531
        %v1545 = vpack.c.b16 %v1534, %v1533
        %v1546 = vpack.c.b16 %v1536, %v1535
        %v1547 = vpack.c.b16 %v1538, %v1537
        %v1548 = vpack.c.b16 %v1540, %v1539
        %1557 = vmatpush.bf16.msra.mxu0 %v1548
        %1558 = vmatpush.bf16.msra.mxu0 %v1547
        %1559 = vmatpush.bf16.msra.mxu0 %v1546
        %1560 = vmatpush.bf16.msra.mxu0 %v1545
        %1561 = vmatpush.bf16.msra.mxu0 %v1544
        %1562 = vmatpush.bf16.msra.mxu0 %v1543
        %1563 = vmatpush.bf16.msra.mxu0 %v1542
        %1564 = vmatpush.bf16.msra.mxu0 %v1541
        %1565 = vmatmul.bf16.gmra.mxu0 %v1488
        %v1566 = vpop.f32.mrf.mxu0
        %v1567 = vadd.f32 %v1507, %v1566
        %v1568 = vpop.f32.mrf.mxu0
        %v1569 = vadd.f32 %v1507, %v1568
        %1570 = vdwg.mxu0
        %v1571 = vtanh.pop %v1567
        %v1572 = vtanh.pop %v1569
        %v1573 = vpack.c.bf16 %v1572, %v1571
        %v1574 = vld [vmem:[#allocation19] sm:$0xf]
        %v1575 = vld [vmem:[#allocation19 + $0x4] sm:$0xf]
        %v1576 = vld [vmem:[#allocation19 + $0x8] sm:$0xf]
        %v1577 = vld [vmem:[#allocation19 + $0xc] sm:$0xf]
        %v1578 = vld [vmem:[#allocation19 + $0x10] sm:$0xf]
        %v1579 = vld [vmem:[#allocation19 + $0x14] sm:$0xf]
        %v1580 = vld [vmem:[#allocation19 + $0x18] sm:$0xf]
        %v1581 = vld [vmem:[#allocation19 + $0x1c] sm:$0xf]
        %v1582 = vld [vmem:[#allocation19 + $0x20] sm:$0xf]
        %v1583 = vld [vmem:[#allocation19 + $0x24] sm:$0xf]
        %v1584 = vld [vmem:[#allocation19 + $0x28] sm:$0xf]
        %v1585 = vld [vmem:[#allocation19 + $0x2c] sm:$0xf]
        %v1586 = vld [vmem:[#allocation19 + $0x30] sm:$0xf]
        %v1587 = vld [vmem:[#allocation19 + $0x34] sm:$0xf]
        %v1588 = vld [vmem:[#allocation19 + $0x38] sm:$0xf]
        %v1589 = vld [vmem:[#allocation19 + $0x3c] sm:$0xf]
        %v1590 = vld [vmem:[%s18] sm:$0x1]
        %v1592 = vperm.slane %v1590, 0
        %v1610 = vunpack.c.l.b16 %v1574
        %v1611 = vunpack.c.l.b16 %v1575
        %v1612 = vunpack.c.l.b16 %v1576
        %v1613 = vunpack.c.l.b16 %v1577
        %v1614 = vunpack.c.l.b16 %v1578
        %v1615 = vunpack.c.l.b16 %v1579
        %v1616 = vunpack.c.l.b16 %v1580
        %v1617 = vunpack.c.l.b16 %v1581
        %v1618 = vunpack.c.l.b16 %v1582
        %v1619 = vunpack.c.l.b16 %v1583
        %v1620 = vunpack.c.l.b16 %v1584
        %v1621 = vunpack.c.l.b16 %v1585
        %v1622 = vunpack.c.l.b16 %v1586
        %v1623 = vunpack.c.l.b16 %v1587
        %v1624 = vunpack.c.l.b16 %v1588
        %v1625 = vunpack.c.l.b16 %v1589
        %v1626 = vpack.c.b16 %v1611, %v1610
        %v1627 = vpack.c.b16 %v1613, %v1612
        %v1628 = vpack.c.b16 %v1615, %v1614
        %v1629 = vpack.c.b16 %v1617, %v1616
        %v1630 = vpack.c.b16 %v1619, %v1618
        %v1631 = vpack.c.b16 %v1621, %v1620
        %v1632 = vpack.c.b16 %v1623, %v1622
        %v1633 = vpack.c.b16 %v1625, %v1624
        %1642 = vmatpush.bf16.msra.mxu0 %v1633
        %1643 = vmatpush.bf16.msra.mxu0 %v1632
        %1644 = vmatpush.bf16.msra.mxu0 %v1631
        %1645 = vmatpush.bf16.msra.mxu0 %v1630
        %1646 = vmatpush.bf16.msra.mxu0 %v1629
        %1647 = vmatpush.bf16.msra.mxu0 %v1628
        %1648 = vmatpush.bf16.msra.mxu0 %v1627
        %1649 = vmatpush.bf16.msra.mxu0 %v1626
        %1650 = vmatmul.bf16.gmra.mxu0 %v1573
        %v1651 = vpop.f32.mrf.mxu0
        %v1652 = vadd.f32 %v1592, %v1651
        %v1653 = vpop.f32.mrf.mxu0
        %v1654 = vadd.f32 %v1592, %v1653
        %1655 = vdwg.mxu0
        %s1656 = smul.u32 %s49, 16
        %v1657 = vlaneseq
        %v1658 = vshrl.u32 %v1657, 7
        %v1659 = vadd.s32 %v1658, 8
        %v1660 = vstv %s1656
        %v1661 = vadd.s32 %v1658, %v1660
        %v1662 = vadd.s32 %v1659, %v1660
        %vm1663 = vcmp.lt.s32.totalorder %v1661, 50
        %vm1664 = vcmp.lt.s32.totalorder %v1662, 50
        %v1665 = vsel %vm1663, %v1652, -inf
        %v1666 = vsel %vm1664, %v1654, -inf
        %v1667 = vpack.c.bf16 %v1665, %v1665
        %v1668 = vpack.c.bf16 %v1666, %v1666
        %1669 = vst [vmem:[%s870] sm:$0xf] %v1667
        %1670 = vst [vmem:[%s870 + $0x4] sm:$0xf] %v1668
        %v1671 = vunpack.c.l.bf16 %v1667
        %v1672 = vunpack.c.l.bf16 %v1668
        %v1673 = vmax.f32 %v1671, %v1672
        %v1674 = vrot.slane %v1673, 4
        %v1675 = vmax.f32 %v1673, %v1674
        %v1676 = vrot.slane %v1675, 2
        %v1677 = vmax.f32 %v1675, %v1676
        %v1678 = vrot.slane %v1677, 1
        %v1679 = vmax.f32 %v1677, %v1678
        %v1680 = vsub.f32 %v1671, %v1679
        %v1681 = vsub.f32 %v1672, %v1679
        %v1682 = vmul.f32 %v1680, 1.442695
        %v1683 = vpow.pop %v1682
        %v1684 = vmul.f32 %v1681, 1.442695
        %v1685 = vpow.pop %v1684
        %v1686 = vadd.f32 %v1683, %v1685
        %v1687 = vrot.slane %v1686, 4
        %v1688 = vadd.f32 %v1686, %v1687
        %v1689 = vrot.slane %v1688, 2
        %v1690 = vadd.f32 %v1688, %v1689
        %v1691 = vrot.slane %v1690, 1
        %v1692 = vadd.f32 %v1690, %v1691
        %1693 = vst [vmem:[%s876] sm:$0x1] %v1679
        %1694 = vst [vmem:[%s882] sm:$0x1] %v1692
        %s1695 = sand.u32 %s466, 1
        %s1696 = scalar_lea.sflag [#allocation4], %s1695
        %s1697 = sand.u32 %s466, 1
        %s1698 = smul.addr %s1697, 8
        %s1699 = scalar_lea.vmem [#allocation20], %s1698
        %s1700 = sand.u32 %s49, 1
        %s1701 = scalar_lea.sflag [#allocation22], %s1700
        %s1702 = sand.u32 %s492, 1
        %s1703 = scalar_lea.vmem [#allocation21], %s1702
        %s1704 = sand.u32 %s49, 1
        %s1705 = scalar_lea.sflag [#allocation22], %s1704
        %s1706 = sand.u32 %s518, 1
        %s1707 = scalar_lea.vmem [#allocation23], %s1706
        // Predicated region
        $region141: #{tpu_custom_call.1} parent=95 // pred_check
          %p1708 = pneg %p476
        $region142: #{tpu_custom_call.1} parent=95 // pred_check_branch
          %1710 = sbr.rel (%p1708) target = $region144
        $region143: #{tpu_custom_call.1} parent=95 // pred_region
          %s1711 = smul.u32 2, %s49
          %1713 = vsyncadd %s1696, 0
          %s1714 = smul.addr %s1711, 4
          %s1715 = scalar_lea.hbm %s19, %s1714
          %s1716 = sshll.u32 %s1699, 4
          %s1717 = int_to_ptr.vmem [resolvable:$true] %s1716
          %s1718 = sshll.u32 %s1715, 4
          %s1719 = int_to_ptr.hbm [resolvable:$true] %s1718
          %1724 = dma.vmem_to_hbm [thread:$0]  %s1717, 128, %s1719, %s1696, 64, 64, 4
        $region144: #{tpu_custom_call.1} parent=95 // pred_fallthru
          _
        // Predicated region
        $region145: #{tpu_custom_call.1} parent=95 // pred_check
          %p1725 = pneg %p502
        $region146: #{tpu_custom_call.1} parent=95 // pred_check_branch
          %1727 = sbr.rel (%p1725) target = $region148
        $region147: #{tpu_custom_call.1} parent=95 // pred_region
          %1729 = vsyncadd %s1701, 0
          %s1730 = scalar_lea.hbm %s20, %s49
          %s1732 = sshll.u32 %s1703, 4
          %s1733 = int_to_ptr.vmem [resolvable:$true] %s1732
          %s1734 = sshll.u32 %s1730, 4
          %s1735 = int_to_ptr.hbm [resolvable:$true] %s1734
          %1737 = dma.vmem_to_hbm [thread:$0]  %s1733, 16, %s1735, %s1701
        $region148: #{tpu_custom_call.1} parent=95 // pred_fallthru
          _
        // Predicated region
        $region149: #{tpu_custom_call.1} parent=95 // pred_check
          %p1738 = pneg %p528
        $region150: #{tpu_custom_call.1} parent=95 // pred_check_branch
          %1740 = sbr.rel (%p1738) target = $region152
        $region151: #{tpu_custom_call.1} parent=95 // pred_region
          %1742 = vsyncadd %s1705, 0
          %s1743 = scalar_lea.hbm %s21, %s49
          %s1745 = sshll.u32 %s1707, 4
          %s1746 = int_to_ptr.vmem [resolvable:$true] %s1745
          %s1747 = sshll.u32 %s1743, 4
          %s1748 = int_to_ptr.hbm [resolvable:$true] %s1747
          %1750 = dma.vmem_to_hbm [thread:$0]  %s1746, 16, %s1748, %s1705
        $region152: #{tpu_custom_call.1} parent=95 // pred_fallthru
          _
      $region96: #{tpu_custom_call.1} parent=5 // pred_fallthru
        _
      %p1751 = scmp.le.s32.totalorder 2, %s44
      // Predicated region
      $region153: #{tpu_custom_call.1} parent=5 // pred_check
        %p1752 = pneg %p1751
      $region154: #{tpu_custom_call.1} parent=5 // pred_check_branch
        %1754 = sbr.rel (%p1752) target = $region156
      $region155: #{tpu_custom_call.1} parent=5 // pred_region
        %s1755 = ssub.s32 %s44, 2
        // Predicated region
        $region157: #{tpu_custom_call.1} parent=155 // pred_check
          %p1756 = pneg %p482
        $region158: #{tpu_custom_call.1} parent=155 // pred_check_branch
          %1758 = sbr.rel (%p1756) target = $region160
        $region159: #{tpu_custom_call.1} parent=155 // pred_region
          %s1759 = sand.u32 %s467, 1
          %s1760 = scalar_lea.sflag [#allocation4], %s1759
          %s1761 = sand.u32 %s467, 1
          %s1762 = smul.addr %s1761, 8
          %s1763 = scalar_lea.vmem [#allocation20], %s1762
          %1765 = dma.done %s1760, 128
        $region160: #{tpu_custom_call.1} parent=155 // pred_fallthru
          _
        // Predicated region
        $region161: #{tpu_custom_call.1} parent=155 // pred_check
          %p1766 = pneg %p508
        $region162: #{tpu_custom_call.1} parent=155 // pred_check_branch
          %1768 = sbr.rel (%p1766) target = $region164
        $region163: #{tpu_custom_call.1} parent=155 // pred_region
          %s1769 = sand.u32 %s50, 1
          %s1770 = scalar_lea.sflag [#allocation22], %s1769
          %s1771 = sand.u32 %s493, 1
          %s1772 = scalar_lea.vmem [#allocation21], %s1771
          %1774 = dma.done %s1770, 16
        $region164: #{tpu_custom_call.1} parent=155 // pred_fallthru
          _
        // Predicated region
        $region165: #{tpu_custom_call.1} parent=155 // pred_check
          %p1775 = pneg %p534
        $region166: #{tpu_custom_call.1} parent=155 // pred_check_branch
          %1777 = sbr.rel (%p1775) target = $region168
        $region167: #{tpu_custom_call.1} parent=155 // pred_region
          %s1778 = sand.u32 %s50, 1
          %s1779 = scalar_lea.sflag [#allocation22], %s1778
          %s1780 = sand.u32 %s519, 1
          %s1781 = scalar_lea.vmem [#allocation23], %s1780
          %1783 = dma.done %s1779, 16
        $region168: #{tpu_custom_call.1} parent=155 // pred_fallthru
          _
      $region156: #{tpu_custom_call.1} parent=5 // pred_fallthru
        _
    $region6: #{tpu_custom_call.1} parent=1 // loop_footer
      %s48 = sadd.s32 1, %s44
    $region7: #{tpu_custom_call.1} parent=1 // loop_footer_branch
      %43 = sbr.rel target = $region3
    $region8: #{tpu_custom_call.1} parent=1 // loop_exit
      _
    %1784 = vsyncpa [#allocation3], 1
    %s1785 = scalar_lea.sflag [#allocation3], 1
    %1786 = vsyncpa %s1785, 1
    %1787 = vsyncpa [#allocation6], 1
    %s1788 = scalar_lea.sflag [#allocation6], 1
    %1789 = vsyncpa %s1788, 1
    %1790 = vsyncpa [#allocation9], 1
    %1791 = vsyncpa [#allocation12], 1
    %1792 = vsyncpa [#allocation15], 1
    %1793 = vsyncpa [#allocation18], 1
    %1794 = vsyncpa [#allocation4], 1
    %s1795 = scalar_lea.sflag [#allocation4], 1
    %1796 = vsyncpa %s1795, 1
    %1797 = vsyncpa [#allocation22], 1
    %s1798 = scalar_lea.sflag [#allocation22], 1
    %1799 = vsyncpa %s1798, 1

</llo_original>
